<compile_context>
chip_gen: v6e
topology: v6e:2x2x1
jax: 0.10.0
libtpu: 0.0.40
codegen_flags: <defaults>
</compile_context>

<pallas_src>
import jax
import jax.numpy as jnp
import numpy as np
from jax import lax
from jax.experimental import pallas as pl
from jax.experimental.pallas import tpu as pltpu

EPS = 1e-5          # BatchNorm2d default eps
NEG_SLOPE = 0.01    # LeakyReLU default negative slope


def _round_up(v, m):
    return (v + m - 1) // m * m


def _fold_conv_bn(w, b, bn):
    """Fold eval-mode BatchNorm (gamma, beta, running_mean, running_var) into conv w/b."""
    gamma, beta, mean, var = bn
    s = gamma / jnp.sqrt(var + EPS)
    return w * s[:, None, None, None], s * (b - mean) + beta


def _prep3x3(w, b, bn, ci_p, co_p, cdt):
    """Fold BN; lay out as (co_p, 9*ci_p) with K-index = (kh*3+kw)*ci_p + cin (tap-major)."""
    wf, bf = _fold_conv_bn(w, b, bn)
    co, ci = wf.shape[0], wf.shape[1]
    wk = jnp.transpose(wf, (0, 2, 3, 1))                              # (co, 3, 3, ci)
    wk = jnp.pad(wk, ((0, co_p - co), (0, 0), (0, 0), (0, ci_p - ci)))
    wk = wk.reshape(co_p, 9 * ci_p)
    bk = jnp.pad(bf, (0, co_p - co)).reshape(co_p, 1)
    return wk.astype(cdt), bk.astype(jnp.float32)


def _prep1x1(w, b, bn, ci_p, co_p, cdt):
    wf, bf = _fold_conv_bn(w, b, bn)
    co, ci = wf.shape[0], wf.shape[1]
    wk = jnp.pad(wf.reshape(co, ci), ((0, co_p - co), (0, ci_p - ci)))
    bk = jnp.pad(bf, (0, co_p - co)).reshape(co_p, 1)
    return wk.astype(cdt), bk.astype(jnp.float32)


def _pick_batch_tile(n):
    """Largest divisor of n (<= 8) that still leaves >= 2 grid steps (keep both v7x TCs fed)."""
    best = 1
    for d in range(1, min(8, n) + 1):
        if n % d == 0 and (n // d >= 2 or n == 1):
            best = d
    return best


def group_forward(x, p1, p2, *, use_bf16=True):
    """Forward of Group_4_5_6_7_8 (two ResBlks), eval-mode. x: (N, Cin, H, W) NCHW."""
    n, c_in, h, w = x.shape
    c_out = p1["w1"].shape[0]
    hw = h * w
    cdt = jnp.bfloat16 if use_bf16 else jnp.float32
    ci_p = _round_up(c_in, 8)        # pad channels to sublane-aligned multiples of 8
    co_p = _round_up(c_out, 8)
    has_skip = "wsk" in p1           # trace-time specialization: identity vs 1x1-conv skip

    # ---- O(params) weight prep: fold BN + bias, stacked-K tap-major layout ----
    w1, b1 = _prep3x3(p1["w1"], p1["b1"], p1["bn1"], ci_p, co_p, cdt)   # (co_p, 9*ci_p)
    w2, b2 = _prep3x3(p1["w2"], p1["b2"], p1["bn2"], co_p, co_p, cdt)   # (co_p, 9*co_p)
    if has_skip:
        wsk, bsk = _prep1x1(p1["wsk"], p1["bsk"], p1["bnsk"], ci_p, co_p, cdt)
        w2 = jnp.concatenate([w2, wsk], axis=1)      # fuse 1x1 skip into conv2's K
        b2 = b2 + bsk
    w3, b3 = _prep3x3(p2["w1"], p2["b1"], p2["bn1"], co_p, co_p, cdt)
    w4, b4 = _prep3x3(p2["w2"], p2["b2"], p2["bn2"], co_p, co_p, cdt)

    # ---- tap offsets + validity masks (circular lane-roll + mask == zero 'same' padding) ----
    offsets = tuple((kh - 1) * w + (kw - 1) for kh in range(3) for kw in range(3))
    row = np.arange(hw) // w
    col = np.arange(hw) % w
    masks_np = np.stack([
        ((row + (kh - 1) >= 0) & (row + (kh - 1) < h) &
         (col + (kw - 1) >= 0) & (col + (kw - 1) < w)).astype(np.float32)
        for kh in range(3) for kw in range(3)])
    masks = jnp.asarray(masks_np)                    # (9, hw) f32

    x_flat = x.reshape(n, c_in, hw)                  # free reshape: no activation transpose
    if ci_p != c_in:
        x_flat = jnp.pad(x_flat, ((0, 0), (0, ci_p - c_in), (0, 0)))

    bt = _pick_batch_tile(n)

    def kernel(x_ref, m_ref, w1_ref, b1_ref, w2_ref, b2_ref,
               w3_ref, b3_ref, w4_ref, b4_ref, o_ref):

        def lrelu(v):
            return jnp.where(v >= 0, v, NEG_SLOPE * v)

        def taps(v, extra=None):
            """v: (C, hw) f32 -> stacked 9-tap operand (9*C [+extra rows], hw) in cdt."""
            planes = []
            for t, off in enumerate(offsets):
                p = v if off == 0 else pltpu.roll(v, (-off) % hw, 1)  # lane-axis rotate (XLU)
                if t != 4:                                            # center tap needs no mask
                    p = p * m_ref[t:t + 1, :]
                planes.append(p)
            if extra is not None:
                planes.append(extra)
            # concat in f32 (8-row chunks -> tile-aligned), single cast to matmul dtype
            return jnp.concatenate(planes, axis=0).astype(cdt)

        def conv(stacked, w_ref, b_ref):
            # one MXU matmul per conv, f32 accumulation; bias/BN folded, added once
            return jnp.dot(w_ref[...], stacked,
                           preferred_element_type=jnp.float32) + b_ref[...]

        # TODO(synk): nn.Dropout(0.75) is stochastic in training mode; modeled as identity
        # (eval mode). BatchNorm uses running stats (eval mode), folded into the conv weights.
        for bi in range(bt):
            xv = x_ref[bi].astype(jnp.float32)                 # (ci_p, hw), spatial lane-dense

            # ResBlk 1
            y1 = lrelu(conv(taps(xv), w1_ref, b1_ref))         # conv + BN + LeakyReLU (f32)
            if has_skip:                                       # 1x1-conv skip fused into K
                z1 = lrelu(conv(taps(y1, extra=xv), w2_ref, b2_ref))
            else:                                              # identity skip (ci == co)
                z1 = lrelu(conv(taps(y1), w2_ref, b2_ref) + xv)

            # ResBlk 2 (identity skip)
            y3 = lrelu(conv(taps(z1), w3_ref, b3_ref))
            y4 = conv(taps(y3), w4_ref, b4_ref)
            o_ref[bi] = lrelu(z1 + y4).astype(o_ref.dtype)     # lane-dense (co_p, hw) store

    # Advisory cost estimate so XLA can schedule around this small custom call.
    k1 = 9 * ci_p
    k2 = 9 * co_p + (ci_p if has_skip else 0)
    k34 = 9 * co_p
    wbytes = (2 if use_bf16 else 4) * co_p * (k1 + k2 + 2 * k34)
    cost = pl.CostEstimate(
        flops=2 * hw * co_p * (k1 + k2 + 2 * k34) * n,
        transcendentals=0,
        bytes_accessed=4 * n * hw * (ci_p + co_p) + wbytes + 4 * 4 * co_p)

    out_flat = pl.pallas_call(
        kernel,
        out_shape=jax.ShapeDtypeStruct((n, co_p, hw), x.dtype),
        grid_spec=pltpu.PrefetchScalarGridSpec(
            num_scalar_prefetch=0,
            grid=(n // bt,),
            in_specs=[
                pl.BlockSpec((bt, ci_p, hw), lambda b: (b, 0, 0)),
                pl.BlockSpec((9, hw), lambda b: (0, 0)),
                pl.BlockSpec(w1.shape, lambda b: (0, 0)),
                pl.BlockSpec(b1.shape, lambda b: (0, 0)),
                pl.BlockSpec(w2.shape, lambda b: (0, 0)),
                pl.BlockSpec(b2.shape, lambda b: (0, 0)),
                pl.BlockSpec(w3.shape, lambda b: (0, 0)),
                pl.BlockSpec(b3.shape, lambda b: (0, 0)),
                pl.BlockSpec(w4.shape, lambda b: (0, 0)),
                pl.BlockSpec(b4.shape, lambda b: (0, 0)),
            ],
            out_specs=pl.BlockSpec((bt, co_p, hw), lambda b: (b, 0, 0)),
        ),
        compiler_params=pltpu.CompilerParams(dimension_semantics=("parallel",)),
        cost_estimate=cost,
    )(x_flat, masks, w1, b1, w2, b2, w3, b3, w4, b4)

    return out_flat[:, :c_out, :].reshape(n, c_out, h, w)


# ---------------- pure-JAX reference (unfolded BN, lax.conv) ----------------
def _leaky_ref(x):
    return jnp.where(x >= 0, x, NEG_SLOPE * x)


def _conv_bn_ref(x, w, b, bn, padding):
    gamma, beta, mean, var = bn
    y = lax.conv_general_dilated(
        x, w, window_strides=(1, 1),
        padding=[(padding, padding), (padding, padding)],
        dimension_numbers=("NCHW", "OIHW", "NCHW"),
        precision=lax.Precision.HIGHEST)
    y = y + b.reshape(1, -1, 1, 1)
    s = (gamma / jnp.sqrt(var + EPS)).reshape(1, -1, 1, 1)
    return s * (y - mean.reshape(1, -1, 1, 1)) + beta.reshape(1, -1, 1, 1)


def _resblk_ref(x, p):
    y1 = _leaky_ref(_conv_bn_ref(x, p["w1"], p["b1"], p["bn1"], 1))
    y2 = _conv_bn_ref(y1, p["w2"], p["b2"], p["bn2"], 1)
    skip = _conv_bn_ref(x, p["wsk"], p["bsk"], p["bnsk"], 0) if "wsk" in p else x
    return _leaky_ref(skip + y2)


def _group_ref(x, p1, p2):
    return _resblk_ref(_resblk_ref(x, p1), p2)


# ---------------- deterministic test ----------------
def _make_conv(key, co, ci, k):
    kw_, kb_ = jax.random.split(key)
    bound = 1.0 / np.sqrt(ci * k * k)
    wgt = jax.random.uniform(kw_, (co, ci, k, k), minval=-bound, maxval=bound,
                             dtype=jnp.float32)
    b = jax.random.uniform(kb_, (co,), minval=-bound, maxval=bound, dtype=jnp.float32)
    return wgt, b


def _make_bn(key, c):
    k1, k2, k3, k4 = jax.random.split(key, 4)
    gamma = jax.random.uniform(k1, (c,), minval=0.5, maxval=1.5, dtype=jnp.float32)
    beta = 0.1 * jax.random.normal(k2, (c,), dtype=jnp.float32)
    mean = 0.1 * jax.random.normal(k3, (c,), dtype=jnp.float32)
    var = jax.random.uniform(k4, (c,), minval=0.5, maxval=1.5, dtype=jnp.float32)
    return (gamma, beta, mean, var)


if __name__ == "__main__":
    key = jax.random.PRNGKey(0)
    batch, ch_in, ch_out, spatial = 2, 4, 8, 16

    keys = jax.random.split(key, 12)
    x = jax.random.normal(keys[0], (batch, ch_in, spatial, spatial), dtype=jnp.float32)

    w1a, b1a = _make_conv(keys[1], ch_out, ch_in, 3)
    w2a, b2a = _make_conv(keys[2], ch_out, ch_out, 3)
    wska, bska = _make_conv(keys[3], ch_out, ch_in, 1)
    p1 = dict(w1=w1a, b1=b1a, bn1=_make_bn(keys[4], ch_out),
              w2=w2a, b2=b2a, bn2=_make_bn(keys[5], ch_out),
              wsk=wska, bsk=bska, bnsk=_make_bn(keys[6], ch_out))

    w1b, b1b = _make_conv(keys[7], ch_out, ch_out, 3)
    w2b, b2b = _make_conv(keys[8], ch_out, ch_out, 3)
    p2 = dict(w1=w1b, b1=b1b, bn1=_make_bn(keys[9], ch_out),
              w2=w2b, b2=b2b, bn2=_make_bn(keys[10], ch_out))

    fwd = jax.jit(group_forward, static_argnames=("use_bf16",))
    ref = jax.block_until_ready(_group_ref(x, p1, p2))

    # f32-operand validation path: tight tolerance against HIGHEST-precision reference.
    out_f32 = jax.block_until_ready(fwd(x, p1, p2, use_bf16=False))
    np.testing.assert_allclose(np.asarray(out_f32), np.asarray(ref), rtol=1e-4, atol=1e-4)

    # bf16-MXU-operand path (perf default on v6e/v7x): f32 accumulation, bf16-bounded tolerance.
    out_bf16 = jax.block_until_ready(fwd(x, p1, p2, use_bf16=True))
    np.testing.assert_allclose(np.asarray(out_bf16), np.asarray(ref), rtol=5e-2, atol=5e-2)

    print("KERNEL_OK")
</pallas_src>

<mosaic_0001>
module attributes {stable_mosaic.version = 11 : i64} {
  func.func @kernel(%arg0: i32, %arg1: memref<1x8x256xf32, #tpu.memory_space<vmem>>, %arg2: memref<9x256xf32, #tpu.memory_space<vmem>>, %arg3: memref<8x72xf32, #tpu.memory_space<vmem>>, %arg4: memref<8x1xf32, #tpu.memory_space<vmem>>, %arg5: memref<8x80xf32, #tpu.memory_space<vmem>>, %arg6: memref<8x1xf32, #tpu.memory_space<vmem>>, %arg7: memref<8x72xf32, #tpu.memory_space<vmem>>, %arg8: memref<8x1xf32, #tpu.memory_space<vmem>>, %arg9: memref<8x72xf32, #tpu.memory_space<vmem>>, %arg10: memref<8x1xf32, #tpu.memory_space<vmem>>, %arg11: memref<1x8x256xf32, #tpu.memory_space<vmem>>) attributes {dimension_semantics = [#tpu.dimension_semantics<parallel>], iteration_bounds = array<i64: 2>, scalar_prefetch = 0 : i64, scratch_operands = 0 : i64, tpu.core_type = #tpu.core_type<tc>, window_params = [{transform_indices = @transform_0, window_bounds = array<i64: 1, 8, 256>}, {pipeline_mode = #tpu.pipeline_mode<synchronous>, transform_indices = @transform_1, window_bounds = array<i64: 9, 256>}, {pipeline_mode = #tpu.pipeline_mode<synchronous>, transform_indices = @transform_2, window_bounds = array<i64: 8, 72>}, {pipeline_mode = #tpu.pipeline_mode<synchronous>, transform_indices = @transform_3, window_bounds = array<i64: 8, 1>}, {pipeline_mode = #tpu.pipeline_mode<synchronous>, transform_indices = @transform_4, window_bounds = array<i64: 8, 80>}, {pipeline_mode = #tpu.pipeline_mode<synchronous>, transform_indices = @transform_5, window_bounds = array<i64: 8, 1>}, {pipeline_mode = #tpu.pipeline_mode<synchronous>, transform_indices = @transform_6, window_bounds = array<i64: 8, 72>}, {pipeline_mode = #tpu.pipeline_mode<synchronous>, transform_indices = @transform_7, window_bounds = array<i64: 8, 1>}, {pipeline_mode = #tpu.pipeline_mode<synchronous>, transform_indices = @transform_8, window_bounds = array<i64: 8, 72>}, {pipeline_mode = #tpu.pipeline_mode<synchronous>, transform_indices = @transform_9, window_bounds = array<i64: 8, 1>}, {transform_indices = @transform_10, window_bounds = array<i64: 1, 8, 256>}]} {
    %c0 = arith.constant 0 : index
    %c0_0 = arith.constant 0 : index
    %c0_1 = arith.constant 0 : index
    %0 = vector.load %arg1[%c0, %c0_0, %c0_1] : memref<1x8x256xf32, #tpu.memory_space<vmem>>, vector<1x8x256xf32>
    %1 = vector.shape_cast %0 : vector<1x8x256xf32> to vector<8x256xf32>
    %c17_i32 = arith.constant 17 : i32
    %2 = tpu.dynamic_rotate %1 by %c17_i32 dim 1 : vector<8x256xf32>, i32 -> vector<8x256xf32>
    %c0_2 = arith.constant 0 : index
    %c0_3 = arith.constant 0 : index
    %3 = vector.load %arg2[%c0_2, %c0_3] : memref<9x256xf32, #tpu.memory_space<vmem>>, vector<1x256xf32>
    %4 = vector.broadcast %3 : vector<1x256xf32> to vector<8x256xf32>
    %5 = arith.mulf %2, %4 : vector<8x256xf32>
    %c16_i32 = arith.constant 16 : i32
    %6 = tpu.dynamic_rotate %1 by %c16_i32 dim 1 : vector<8x256xf32>, i32 -> vector<8x256xf32>
    %c1 = arith.constant 1 : index
    %c0_4 = arith.constant 0 : index
    %7 = vector.load %arg2[%c1, %c0_4] : memref<9x256xf32, #tpu.memory_space<vmem>>, vector<1x256xf32>
    %8 = vector.broadcast %7 : vector<1x256xf32> to vector<8x256xf32>
    %9 = arith.mulf %6, %8 : vector<8x256xf32>
    %c15_i32 = arith.constant 15 : i32
    %10 = tpu.dynamic_rotate %1 by %c15_i32 dim 1 : vector<8x256xf32>, i32 -> vector<8x256xf32>
    %c2 = arith.constant 2 : index
    %c0_5 = arith.constant 0 : index
    %11 = vector.load %arg2[%c2, %c0_5] : memref<9x256xf32, #tpu.memory_space<vmem>>, vector<1x256xf32>
    %12 = vector.broadcast %11 : vector<1x256xf32> to vector<8x256xf32>
    %13 = arith.mulf %10, %12 : vector<8x256xf32>
    %c1_i32 = arith.constant 1 : i32
    %14 = tpu.dynamic_rotate %1 by %c1_i32 dim 1 : vector<8x256xf32>, i32 -> vector<8x256xf32>
    %c3 = arith.constant 3 : index
    %c0_6 = arith.constant 0 : index
    %15 = vector.load %arg2[%c3, %c0_6] : memref<9x256xf32, #tpu.memory_space<vmem>>, vector<1x256xf32>
    %16 = vector.broadcast %15 : vector<1x256xf32> to vector<8x256xf32>
    %17 = arith.mulf %14, %16 : vector<8x256xf32>
    %c255_i32 = arith.constant 255 : i32
    %18 = tpu.dynamic_rotate %1 by %c255_i32 dim 1 : vector<8x256xf32>, i32 -> vector<8x256xf32>
    %c5 = arith.constant 5 : index
    %c0_7 = arith.constant 0 : index
    %19 = vector.load %arg2[%c5, %c0_7] : memref<9x256xf32, #tpu.memory_space<vmem>>, vector<1x256xf32>
    %20 = vector.broadcast %19 : vector<1x256xf32> to vector<8x256xf32>
    %21 = arith.mulf %18, %20 : vector<8x256xf32>
    %c241_i32 = arith.constant 241 : i32
    %22 = tpu.dynamic_rotate %1 by %c241_i32 dim 1 : vector<8x256xf32>, i32 -> vector<8x256xf32>
    %c6 = arith.constant 6 : index
    %c0_8 = arith.constant 0 : index
    %23 = vector.load %arg2[%c6, %c0_8] : memref<9x256xf32, #tpu.memory_space<vmem>>, vector<1x256xf32>
    %24 = vector.broadcast %23 : vector<1x256xf32> to vector<8x256xf32>
    %25 = arith.mulf %22, %24 : vector<8x256xf32>
    %c240_i32 = arith.constant 240 : i32
    %26 = tpu.dynamic_rotate %1 by %c240_i32 dim 1 : vector<8x256xf32>, i32 -> vector<8x256xf32>
    %c7 = arith.constant 7 : index
    %c0_9 = arith.constant 0 : index
    %27 = vector.load %arg2[%c7, %c0_9] : memref<9x256xf32, #tpu.memory_space<vmem>>, vector<1x256xf32>
    %28 = vector.broadcast %27 : vector<1x256xf32> to vector<8x256xf32>
    %29 = arith.mulf %26, %28 : vector<8x256xf32>
    %c239_i32 = arith.constant 239 : i32
    %30 = tpu.dynamic_rotate %1 by %c239_i32 dim 1 : vector<8x256xf32>, i32 -> vector<8x256xf32>
    %c8 = arith.constant 8 : index
    %c0_10 = arith.constant 0 : index
    %31 = vector.load %arg2[%c8, %c0_10] : memref<9x256xf32, #tpu.memory_space<vmem>>, vector<1x256xf32>
    %32 = vector.broadcast %31 : vector<1x256xf32> to vector<8x256xf32>
    %33 = arith.mulf %30, %32 : vector<8x256xf32>
    %34 = tpu.concatenate %5, %9, %13, %17, %1, %21, %25, %29, %33 in 0 : vector<8x256xf32>, vector<8x256xf32>, vector<8x256xf32>, vector<8x256xf32>, vector<8x256xf32>, vector<8x256xf32>, vector<8x256xf32>, vector<8x256xf32>, vector<8x256xf32> -> vector<72x256xf32>
    %c0_11 = arith.constant 0 : index
    %c0_12 = arith.constant 0 : index
    %35 = vector.load %arg3[%c0_11, %c0_12] : memref<8x72xf32, #tpu.memory_space<vmem>>, vector<8x72xf32>
    %cst = arith.constant dense<0.000000e+00> : vector<8x256xf32>
    %36 = tpu.matmul %35, %34, %cst {dimension_numbers = #tpu.dot_dimension_numbers<[1], [0], [0], [1], [0, 0, 1, 1], [], []>} : vector<8x72xf32>, vector<72x256xf32>, vector<8x256xf32> -> vector<8x256xf32>
    %c0_13 = arith.constant 0 : index
    %c0_14 = arith.constant 0 : index
    %37 = vector.load %arg4[%c0_13, %c0_14] : memref<8x1xf32, #tpu.memory_space<vmem>>, vector<8x1xf32>
    %38 = vector.broadcast %37 : vector<8x1xf32> to vector<8x256xf32>
    %39 = arith.addf %36, %38 : vector<8x256xf32>
    %cst_15 = arith.constant 0.000000e+00 : f32
    %40 = vector.broadcast %cst_15 : f32 to vector<8x256xf32>
    %41 = arith.cmpf oge, %39, %40 : vector<8x256xf32>
    %cst_16 = arith.constant 0.00999999977 : f32
    %42 = vector.broadcast %cst_16 : f32 to vector<8x256xf32>
    %43 = arith.mulf %42, %39 : vector<8x256xf32>
    %44 = arith.select %41, %39, %43 : vector<8x256xi1>, vector<8x256xf32>
    %c17_i32_17 = arith.constant 17 : i32
    %45 = tpu.dynamic_rotate %44 by %c17_i32_17 dim 1 : vector<8x256xf32>, i32 -> vector<8x256xf32>
    %c0_18 = arith.constant 0 : index
    %c0_19 = arith.constant 0 : index
    %46 = vector.load %arg2[%c0_18, %c0_19] : memref<9x256xf32, #tpu.memory_space<vmem>>, vector<1x256xf32>
    %47 = vector.broadcast %46 : vector<1x256xf32> to vector<8x256xf32>
    %48 = arith.mulf %45, %47 : vector<8x256xf32>
    %c16_i32_20 = arith.constant 16 : i32
    %49 = tpu.dynamic_rotate %44 by %c16_i32_20 dim 1 : vector<8x256xf32>, i32 -> vector<8x256xf32>
    %c1_21 = arith.constant 1 : index
    %c0_22 = arith.constant 0 : index
    %50 = vector.load %arg2[%c1_21, %c0_22] : memref<9x256xf32, #tpu.memory_space<vmem>>, vector<1x256xf32>
    %51 = vector.broadcast %50 : vector<1x256xf32> to vector<8x256xf32>
    %52 = arith.mulf %49, %51 : vector<8x256xf32>
    %c15_i32_23 = arith.constant 15 : i32
    %53 = tpu.dynamic_rotate %44 by %c15_i32_23 dim 1 : vector<8x256xf32>, i32 -> vector<8x256xf32>
    %c2_24 = arith.constant 2 : index
    %c0_25 = arith.constant 0 : index
    %54 = vector.load %arg2[%c2_24, %c0_25] : memref<9x256xf32, #tpu.memory_space<vmem>>, vector<1x256xf32>
    %55 = vector.broadcast %54 : vector<1x256xf32> to vector<8x256xf32>
    %56 = arith.mulf %53, %55 : vector<8x256xf32>
    %c1_i32_26 = arith.constant 1 : i32
    %57 = tpu.dynamic_rotate %44 by %c1_i32_26 dim 1 : vector<8x256xf32>, i32 -> vector<8x256xf32>
    %c3_27 = arith.constant 3 : index
    %c0_28 = arith.constant 0 : index
    %58 = vector.load %arg2[%c3_27, %c0_28] : memref<9x256xf32, #tpu.memory_space<vmem>>, vector<1x256xf32>
    %59 = vector.broadcast %58 : vector<1x256xf32> to vector<8x256xf32>
    %60 = arith.mulf %57, %59 : vector<8x256xf32>
    %c255_i32_29 = arith.constant 255 : i32
    %61 = tpu.dynamic_rotate %44 by %c255_i32_29 dim 1 : vector<8x256xf32>, i32 -> vector<8x256xf32>
    %c5_30 = arith.constant 5 : index
    %c0_31 = arith.constant 0 : index
    %62 = vector.load %arg2[%c5_30, %c0_31] : memref<9x256xf32, #tpu.memory_space<vmem>>, vector<1x256xf32>
    %63 = vector.broadcast %62 : vector<1x256xf32> to vector<8x256xf32>
    %64 = arith.mulf %61, %63 : vector<8x256xf32>
    %c241_i32_32 = arith.constant 241 : i32
    %65 = tpu.dynamic_rotate %44 by %c241_i32_32 dim 1 : vector<8x256xf32>, i32 -> vector<8x256xf32>
    %c6_33 = arith.constant 6 : index
    %c0_34 = arith.constant 0 : index
    %66 = vector.load %arg2[%c6_33, %c0_34] : memref<9x256xf32, #tpu.memory_space<vmem>>, vector<1x256xf32>
    %67 = vector.broadcast %66 : vector<1x256xf32> to vector<8x256xf32>
    %68 = arith.mulf %65, %67 : vector<8x256xf32>
    %c240_i32_35 = arith.constant 240 : i32
    %69 = tpu.dynamic_rotate %44 by %c240_i32_35 dim 1 : vector<8x256xf32>, i32 -> vector<8x256xf32>
    %c7_36 = arith.constant 7 : index
    %c0_37 = arith.constant 0 : index
    %70 = vector.load %arg2[%c7_36, %c0_37] : memref<9x256xf32, #tpu.memory_space<vmem>>, vector<1x256xf32>
    %71 = vector.broadcast %70 : vector<1x256xf32> to vector<8x256xf32>
    %72 = arith.mulf %69, %71 : vector<8x256xf32>
    %c239_i32_38 = arith.constant 239 : i32
    %73 = tpu.dynamic_rotate %44 by %c239_i32_38 dim 1 : vector<8x256xf32>, i32 -> vector<8x256xf32>
    %c8_39 = arith.constant 8 : index
    %c0_40 = arith.constant 0 : index
    %74 = vector.load %arg2[%c8_39, %c0_40] : memref<9x256xf32, #tpu.memory_space<vmem>>, vector<1x256xf32>
    %75 = vector.broadcast %74 : vector<1x256xf32> to vector<8x256xf32>
    %76 = arith.mulf %73, %75 : vector<8x256xf32>
    %77 = tpu.concatenate %48, %52, %56, %60, %44, %64, %68, %72, %76, %1 in 0 : vector<8x256xf32>, vector<8x256xf32>, vector<8x256xf32>, vector<8x256xf32>, vector<8x256xf32>, vector<8x256xf32>, vector<8x256xf32>, vector<8x256xf32>, vector<8x256xf32>, vector<8x256xf32> -> vector<80x256xf32>
    %c0_41 = arith.constant 0 : index
    %c0_42 = arith.constant 0 : index
    %78 = vector.load %arg5[%c0_41, %c0_42] : memref<8x80xf32, #tpu.memory_space<vmem>>, vector<8x80xf32>
    %cst_43 = arith.constant dense<0.000000e+00> : vector<8x256xf32>
    %79 = tpu.matmul %78, %77, %cst_43 {dimension_numbers = #tpu.dot_dimension_numbers<[1], [0], [0], [1], [0, 0, 1, 1], [], []>} : vector<8x80xf32>, vector<80x256xf32>, vector<8x256xf32> -> vector<8x256xf32>
    %c0_44 = arith.constant 0 : index
    %c0_45 = arith.constant 0 : index
    %80 = vector.load %arg6[%c0_44, %c0_45] : memref<8x1xf32, #tpu.memory_space<vmem>>, vector<8x1xf32>
    %81 = vector.broadcast %80 : vector<8x1xf32> to vector<8x256xf32>
    %82 = arith.addf %79, %81 : vector<8x256xf32>
    %cst_46 = arith.constant 0.000000e+00 : f32
    %83 = vector.broadcast %cst_46 : f32 to vector<8x256xf32>
    %84 = arith.cmpf oge, %82, %83 : vector<8x256xf32>
    %cst_47 = arith.constant 0.00999999977 : f32
    %85 = vector.broadcast %cst_47 : f32 to vector<8x256xf32>
    %86 = arith.mulf %85, %82 : vector<8x256xf32>
    %87 = arith.select %84, %82, %86 : vector<8x256xi1>, vector<8x256xf32>
    %c17_i32_48 = arith.constant 17 : i32
    %88 = tpu.dynamic_rotate %87 by %c17_i32_48 dim 1 : vector<8x256xf32>, i32 -> vector<8x256xf32>
    %c0_49 = arith.constant 0 : index
    %c0_50 = arith.constant 0 : index
    %89 = vector.load %arg2[%c0_49, %c0_50] : memref<9x256xf32, #tpu.memory_space<vmem>>, vector<1x256xf32>
    %90 = vector.broadcast %89 : vector<1x256xf32> to vector<8x256xf32>
    %91 = arith.mulf %88, %90 : vector<8x256xf32>
    %c16_i32_51 = arith.constant 16 : i32
    %92 = tpu.dynamic_rotate %87 by %c16_i32_51 dim 1 : vector<8x256xf32>, i32 -> vector<8x256xf32>
    %c1_52 = arith.constant 1 : index
    %c0_53 = arith.constant 0 : index
    %93 = vector.load %arg2[%c1_52, %c0_53] : memref<9x256xf32, #tpu.memory_space<vmem>>, vector<1x256xf32>
    %94 = vector.broadcast %93 : vector<1x256xf32> to vector<8x256xf32>
    %95 = arith.mulf %92, %94 : vector<8x256xf32>
    %c15_i32_54 = arith.constant 15 : i32
    %96 = tpu.dynamic_rotate %87 by %c15_i32_54 dim 1 : vector<8x256xf32>, i32 -> vector<8x256xf32>
    %c2_55 = arith.constant 2 : index
    %c0_56 = arith.constant 0 : index
    %97 = vector.load %arg2[%c2_55, %c0_56] : memref<9x256xf32, #tpu.memory_space<vmem>>, vector<1x256xf32>
    %98 = vector.broadcast %97 : vector<1x256xf32> to vector<8x256xf32>
    %99 = arith.mulf %96, %98 : vector<8x256xf32>
    %c1_i32_57 = arith.constant 1 : i32
    %100 = tpu.dynamic_rotate %87 by %c1_i32_57 dim 1 : vector<8x256xf32>, i32 -> vector<8x256xf32>
    %c3_58 = arith.constant 3 : index
    %c0_59 = arith.constant 0 : index
    %101 = vector.load %arg2[%c3_58, %c0_59] : memref<9x256xf32, #tpu.memory_space<vmem>>, vector<1x256xf32>
    %102 = vector.broadcast %101 : vector<1x256xf32> to vector<8x256xf32>
    %103 = arith.mulf %100, %102 : vector<8x256xf32>
    %c255_i32_60 = arith.constant 255 : i32
    %104 = tpu.dynamic_rotate %87 by %c255_i32_60 dim 1 : vector<8x256xf32>, i32 -> vector<8x256xf32>
    %c5_61 = arith.constant 5 : index
    %c0_62 = arith.constant 0 : index
    %105 = vector.load %arg2[%c5_61, %c0_62] : memref<9x256xf32, #tpu.memory_space<vmem>>, vector<1x256xf32>
    %106 = vector.broadcast %105 : vector<1x256xf32> to vector<8x256xf32>
    %107 = arith.mulf %104, %106 : vector<8x256xf32>
    %c241_i32_63 = arith.constant 241 : i32
    %108 = tpu.dynamic_rotate %87 by %c241_i32_63 dim 1 : vector<8x256xf32>, i32 -> vector<8x256xf32>
    %c6_64 = arith.constant 6 : index
    %c0_65 = arith.constant 0 : index
    %109 = vector.load %arg2[%c6_64, %c0_65] : memref<9x256xf32, #tpu.memory_space<vmem>>, vector<1x256xf32>
    %110 = vector.broadcast %109 : vector<1x256xf32> to vector<8x256xf32>
    %111 = arith.mulf %108, %110 : vector<8x256xf32>
    %c240_i32_66 = arith.constant 240 : i32
    %112 = tpu.dynamic_rotate %87 by %c240_i32_66 dim 1 : vector<8x256xf32>, i32 -> vector<8x256xf32>
    %c7_67 = arith.constant 7 : index
    %c0_68 = arith.constant 0 : index
    %113 = vector.load %arg2[%c7_67, %c0_68] : memref<9x256xf32, #tpu.memory_space<vmem>>, vector<1x256xf32>
    %114 = vector.broadcast %113 : vector<1x256xf32> to vector<8x256xf32>
    %115 = arith.mulf %112, %114 : vector<8x256xf32>
    %c239_i32_69 = arith.constant 239 : i32
    %116 = tpu.dynamic_rotate %87 by %c239_i32_69 dim 1 : vector<8x256xf32>, i32 -> vector<8x256xf32>
    %c8_70 = arith.constant 8 : index
    %c0_71 = arith.constant 0 : index
    %117 = vector.load %arg2[%c8_70, %c0_71] : memref<9x256xf32, #tpu.memory_space<vmem>>, vector<1x256xf32>
    %118 = vector.broadcast %117 : vector<1x256xf32> to vector<8x256xf32>
    %119 = arith.mulf %116, %118 : vector<8x256xf32>
    %120 = tpu.concatenate %91, %95, %99, %103, %87, %107, %111, %115, %119 in 0 : vector<8x256xf32>, vector<8x256xf32>, vector<8x256xf32>, vector<8x256xf32>, vector<8x256xf32>, vector<8x256xf32>, vector<8x256xf32>, vector<8x256xf32>, vector<8x256xf32> -> vector<72x256xf32>
    %c0_72 = arith.constant 0 : index
    %c0_73 = arith.constant 0 : index
    %121 = vector.load %arg7[%c0_72, %c0_73] : memref<8x72xf32, #tpu.memory_space<vmem>>, vector<8x72xf32>
    %cst_74 = arith.constant dense<0.000000e+00> : vector<8x256xf32>
    %122 = tpu.matmul %121, %120, %cst_74 {dimension_numbers = #tpu.dot_dimension_numbers<[1], [0], [0], [1], [0, 0, 1, 1], [], []>} : vector<8x72xf32>, vector<72x256xf32>, vector<8x256xf32> -> vector<8x256xf32>
    %c0_75 = arith.constant 0 : index
    %c0_76 = arith.constant 0 : index
    %123 = vector.load %arg8[%c0_75, %c0_76] : memref<8x1xf32, #tpu.memory_space<vmem>>, vector<8x1xf32>
    %124 = vector.broadcast %123 : vector<8x1xf32> to vector<8x256xf32>
    %125 = arith.addf %122, %124 : vector<8x256xf32>
    %cst_77 = arith.constant 0.000000e+00 : f32
    %126 = vector.broadcast %cst_77 : f32 to vector<8x256xf32>
    %127 = arith.cmpf oge, %125, %126 : vector<8x256xf32>
    %cst_78 = arith.constant 0.00999999977 : f32
    %128 = vector.broadcast %cst_78 : f32 to vector<8x256xf32>
    %129 = arith.mulf %128, %125 : vector<8x256xf32>
    %130 = arith.select %127, %125, %129 : vector<8x256xi1>, vector<8x256xf32>
    %c17_i32_79 = arith.constant 17 : i32
    %131 = tpu.dynamic_rotate %130 by %c17_i32_79 dim 1 : vector<8x256xf32>, i32 -> vector<8x256xf32>
    %c0_80 = arith.constant 0 : index
    %c0_81 = arith.constant 0 : index
    %132 = vector.load %arg2[%c0_80, %c0_81] : memref<9x256xf32, #tpu.memory_space<vmem>>, vector<1x256xf32>
    %133 = vector.broadcast %132 : vector<1x256xf32> to vector<8x256xf32>
    %134 = arith.mulf %131, %133 : vector<8x256xf32>
    %c16_i32_82 = arith.constant 16 : i32
    %135 = tpu.dynamic_rotate %130 by %c16_i32_82 dim 1 : vector<8x256xf32>, i32 -> vector<8x256xf32>
    %c1_83 = arith.constant 1 : index
    %c0_84 = arith.constant 0 : index
    %136 = vector.load %arg2[%c1_83, %c0_84] : memref<9x256xf32, #tpu.memory_space<vmem>>, vector<1x256xf32>
    %137 = vector.broadcast %136 : vector<1x256xf32> to vector<8x256xf32>
    %138 = arith.mulf %135, %137 : vector<8x256xf32>
    %c15_i32_85 = arith.constant 15 : i32
    %139 = tpu.dynamic_rotate %130 by %c15_i32_85 dim 1 : vector<8x256xf32>, i32 -> vector<8x256xf32>
    %c2_86 = arith.constant 2 : index
    %c0_87 = arith.constant 0 : index
    %140 = vector.load %arg2[%c2_86, %c0_87] : memref<9x256xf32, #tpu.memory_space<vmem>>, vector<1x256xf32>
    %141 = vector.broadcast %140 : vector<1x256xf32> to vector<8x256xf32>
    %142 = arith.mulf %139, %141 : vector<8x256xf32>
    %c1_i32_88 = arith.constant 1 : i32
    %143 = tpu.dynamic_rotate %130 by %c1_i32_88 dim 1 : vector<8x256xf32>, i32 -> vector<8x256xf32>
    %c3_89 = arith.constant 3 : index
    %c0_90 = arith.constant 0 : index
    %144 = vector.load %arg2[%c3_89, %c0_90] : memref<9x256xf32, #tpu.memory_space<vmem>>, vector<1x256xf32>
    %145 = vector.broadcast %144 : vector<1x256xf32> to vector<8x256xf32>
    %146 = arith.mulf %143, %145 : vector<8x256xf32>
    %c255_i32_91 = arith.constant 255 : i32
    %147 = tpu.dynamic_rotate %130 by %c255_i32_91 dim 1 : vector<8x256xf32>, i32 -> vector<8x256xf32>
    %c5_92 = arith.constant 5 : index
    %c0_93 = arith.constant 0 : index
    %148 = vector.load %arg2[%c5_92, %c0_93] : memref<9x256xf32, #tpu.memory_space<vmem>>, vector<1x256xf32>
    %149 = vector.broadcast %148 : vector<1x256xf32> to vector<8x256xf32>
    %150 = arith.mulf %147, %149 : vector<8x256xf32>
    %c241_i32_94 = arith.constant 241 : i32
    %151 = tpu.dynamic_rotate %130 by %c241_i32_94 dim 1 : vector<8x256xf32>, i32 -> vector<8x256xf32>
    %c6_95 = arith.constant 6 : index
    %c0_96 = arith.constant 0 : index
    %152 = vector.load %arg2[%c6_95, %c0_96] : memref<9x256xf32, #tpu.memory_space<vmem>>, vector<1x256xf32>
    %153 = vector.broadcast %152 : vector<1x256xf32> to vector<8x256xf32>
    %154 = arith.mulf %151, %153 : vector<8x256xf32>
    %c240_i32_97 = arith.constant 240 : i32
    %155 = tpu.dynamic_rotate %130 by %c240_i32_97 dim 1 : vector<8x256xf32>, i32 -> vector<8x256xf32>
    %c7_98 = arith.constant 7 : index
    %c0_99 = arith.constant 0 : index
    %156 = vector.load %arg2[%c7_98, %c0_99] : memref<9x256xf32, #tpu.memory_space<vmem>>, vector<1x256xf32>
    %157 = vector.broadcast %156 : vector<1x256xf32> to vector<8x256xf32>
    %158 = arith.mulf %155, %157 : vector<8x256xf32>
    %c239_i32_100 = arith.constant 239 : i32
    %159 = tpu.dynamic_rotate %130 by %c239_i32_100 dim 1 : vector<8x256xf32>, i32 -> vector<8x256xf32>
    %c8_101 = arith.constant 8 : index
    %c0_102 = arith.constant 0 : index
    %160 = vector.load %arg2[%c8_101, %c0_102] : memref<9x256xf32, #tpu.memory_space<vmem>>, vector<1x256xf32>
    %161 = vector.broadcast %160 : vector<1x256xf32> to vector<8x256xf32>
    %162 = arith.mulf %159, %161 : vector<8x256xf32>
    %163 = tpu.concatenate %134, %138, %142, %146, %130, %150, %154, %158, %162 in 0 : vector<8x256xf32>, vector<8x256xf32>, vector<8x256xf32>, vector<8x256xf32>, vector<8x256xf32>, vector<8x256xf32>, vector<8x256xf32>, vector<8x256xf32>, vector<8x256xf32> -> vector<72x256xf32>
    %c0_103 = arith.constant 0 : index
    %c0_104 = arith.constant 0 : index
    %164 = vector.load %arg9[%c0_103, %c0_104] : memref<8x72xf32, #tpu.memory_space<vmem>>, vector<8x72xf32>
    %cst_105 = arith.constant dense<0.000000e+00> : vector<8x256xf32>
    %165 = tpu.matmul %164, %163, %cst_105 {dimension_numbers = #tpu.dot_dimension_numbers<[1], [0], [0], [1], [0, 0, 1, 1], [], []>} : vector<8x72xf32>, vector<72x256xf32>, vector<8x256xf32> -> vector<8x256xf32>
    %c0_106 = arith.constant 0 : index
    %c0_107 = arith.constant 0 : index
    %166 = vector.load %arg10[%c0_106, %c0_107] : memref<8x1xf32, #tpu.memory_space<vmem>>, vector<8x1xf32>
    %167 = vector.broadcast %166 : vector<8x1xf32> to vector<8x256xf32>
    %168 = arith.addf %165, %167 : vector<8x256xf32>
    %169 = arith.addf %87, %168 : vector<8x256xf32>
    %cst_108 = arith.constant 0.000000e+00 : f32
    %170 = vector.broadcast %cst_108 : f32 to vector<8x256xf32>
    %171 = arith.cmpf oge, %169, %170 : vector<8x256xf32>
    %cst_109 = arith.constant 0.00999999977 : f32
    %172 = vector.broadcast %cst_109 : f32 to vector<8x256xf32>
    %173 = arith.mulf %172, %169 : vector<8x256xf32>
    %174 = arith.select %171, %169, %173 : vector<8x256xi1>, vector<8x256xf32>
    %c0_110 = arith.constant 0 : index
    %c0_111 = arith.constant 0 : index
    %c0_112 = arith.constant 0 : index
    %175 = vector.load %arg11[%c0_110, %c0_111, %c0_112] : memref<1x8x256xf32, #tpu.memory_space<vmem>>, vector<1x8x256xf32>
    %176 = vector.shape_cast %175 : vector<1x8x256xf32> to vector<8x256xf32>
    %177 = vector.shape_cast %174 : vector<8x256xf32> to vector<1x8x256xf32>
    tpu.vector_store %arg11[%c0_110, %c0_111, %c0_112], %177 {strides = array<i32>} : memref<1x8x256xf32, #tpu.memory_space<vmem>>, vector<1x8x256xf32>,
    return
  }
  func.func @transform_0(%arg0: i32) -> (i32, i32, i32) {
    %c0_i32 = arith.constant 0 : i32
    %c0_i32_0 = arith.constant 0 : i32
    %c0_i32_1 = arith.constant 0 : i32
    return %arg0, %c0_i32, %c0_i32_0 : i32, i32, i32
  }
  func.func @transform_1(%arg0: i32) -> (i32, i32) {
    %c0_i32 = arith.constant 0 : i32
    %c0_i32_0 = arith.constant 0 : i32
    %c0_i32_1 = arith.constant 0 : i32
    return %c0_i32, %c0_i32_0 : i32, i32
  }
  func.func @transform_2(%arg0: i32) -> (i32, i32) {
    %c0_i32 = arith.constant 0 : i32
    %c0_i32_0 = arith.constant 0 : i32
    %c0_i32_1 = arith.constant 0 : i32
    return %c0_i32, %c0_i32_0 : i32, i32
  }
  func.func @transform_3(%arg0: i32) -> (i32, i32) {
    %c0_i32 = arith.constant 0 : i32
    %c0_i32_0 = arith.constant 0 : i32
    %c0_i32_1 = arith.constant 0 : i32
    return %c0_i32, %c0_i32_0 : i32, i32
  }
  func.func @transform_4(%arg0: i32) -> (i32, i32) {
    %c0_i32 = arith.constant 0 : i32
    %c0_i32_0 = arith.constant 0 : i32
    %c0_i32_1 = arith.constant 0 : i32
    return %c0_i32, %c0_i32_0 : i32, i32
  }
  func.func @transform_5(%arg0: i32) -> (i32, i32) {
    %c0_i32 = arith.constant 0 : i32
    %c0_i32_0 = arith.constant 0 : i32
    %c0_i32_1 = arith.constant 0 : i32
    return %c0_i32, %c0_i32_0 : i32, i32
  }
  func.func @transform_6(%arg0: i32) -> (i32, i32) {
    %c0_i32 = arith.constant 0 : i32
    %c0_i32_0 = arith.constant 0 : i32
    %c0_i32_1 = arith.constant 0 : i32
    return %c0_i32, %c0_i32_0 : i32, i32
  }
  func.func @transform_7(%arg0: i32) -> (i32, i32) {
    %c0_i32 = arith.constant 0 : i32
    %c0_i32_0 = arith.constant 0 : i32
    %c0_i32_1 = arith.constant 0 : i32
    return %c0_i32, %c0_i32_0 : i32, i32
  }
  func.func @transform_8(%arg0: i32) -> (i32, i32) {
    %c0_i32 = arith.constant 0 : i32
    %c0_i32_0 = arith.constant 0 : i32
    %c0_i32_1 = arith.constant 0 : i32
    return %c0_i32, %c0_i32_0 : i32, i32
  }
  func.func @transform_9(%arg0: i32) -> (i32, i32) {
    %c0_i32 = arith.constant 0 : i32
    %c0_i32_0 = arith.constant 0 : i32
    %c0_i32_1 = arith.constant 0 : i32
    return %c0_i32, %c0_i32_0 : i32, i32
  }
  func.func @transform_10(%arg0: i32) -> (i32, i32, i32) {
    %c0_i32 = arith.constant 0 : i32
    %c0_i32_0 = arith.constant 0 : i32
    %c0_i32_1 = arith.constant 0 : i32
    return %arg0, %c0_i32, %c0_i32_0 : i32, i32, i32
  }
}

</mosaic_0001>

<llo_original>
// kernel: group_forward.1
$region0: #{group_forward.1}
  #allocation0 [shape = 'u32[]', space=smem, size = 0x4, offset = 0x4, fixed_abs, tag = 'smem constant byte address 0x4 - core index']
  #allocation1 [shape = 'u32[144,128]{1,0:T(1,128)}', space=vmem, size = 0x12000, scoped, tag = 'internal scratch']
  %s0 = inlined_call_operand.vmem [shape: f32[2,8,256], index: 0, kind: input, shape index: {}]
  %s1 = inlined_call_operand.vmem [shape: f32[9,256], index: 1, kind: input, shape index: {}]
  %s2 = inlined_call_operand.vmem [shape: f32[8,72], index: 2, kind: input, shape index: {}]
  %s3 = inlined_call_operand.vmem [shape: f32[8,1], index: 3, kind: input, shape index: {}]
  %s4 = inlined_call_operand.vmem [shape: f32[8,80], index: 4, kind: input, shape index: {}]
  %s5 = inlined_call_operand.vmem [shape: f32[8,1], index: 5, kind: input, shape index: {}]
  %s6 = inlined_call_operand.vmem [shape: f32[8,72], index: 6, kind: input, shape index: {}]
  %s7 = inlined_call_operand.vmem [shape: f32[8,1], index: 7, kind: input, shape index: {}]
  %s8 = inlined_call_operand.vmem [shape: f32[8,72], index: 8, kind: input, shape index: {}]
  %s9 = inlined_call_operand.vmem [shape: f32[8,1], index: 9, kind: input, shape index: {}]
  %s10 = inlined_call_operand.vmem [shape: f32[2,8,256], index: 10, kind: output, shape index: {}]
  %s11 = sld [smem:[#allocation0]]
  $region73: #{group_forward.1} parent=0
    _
  %s13 = ssub.s32 1, %s11
  %s14 = scalar_select 0, %s13, %s11
  loop: start=0, step=1, limit=4
  $region2: #{group_forward.1} parent=0 // loop_pre_header
    _
  $region3: #{group_forward.1} parent=0 // loop_header
    %s16 = sphi 0, %s20
    %p17 = scmp.ge.s32.totalorder %s16, 4
    %s26 = sphi 0, %s28
    %s29 = sphi 0, %s26
    %s30 = sphi 0, %s29
    %s46 = sphi 0, %s30
    %s50 = sphi 0, %s50
    %s52 = sphi 0, %s50
    %s53 = sphi 0, %s52
    %s67 = sphi 0, %s53
    %s71 = sphi 0, %s71
    %s73 = sphi 0, %s71
    %s74 = sphi 0, %s73
    %s88 = sphi 0, %s74
    %s92 = sphi 0, %s92
    %s94 = sphi 0, %s92
    %s95 = sphi 0, %s94
    %s109 = sphi 0, %s95
    %s113 = sphi 0, %s113
    %s115 = sphi 0, %s113
    %s116 = sphi 0, %s115
    %s130 = sphi 0, %s116
    %s134 = sphi 0, %s134
    %s136 = sphi 0, %s134
    %s137 = sphi 0, %s136
    %s151 = sphi 0, %s137
    %s155 = sphi 0, %s155
    %s157 = sphi 0, %s155
    %s158 = sphi 0, %s157
    %s172 = sphi 0, %s158
    %s176 = sphi 0, %s176
    %s178 = sphi 0, %s176
    %s179 = sphi 0, %s178
    %s193 = sphi 0, %s179
    %s197 = sphi 0, %s197
    %s199 = sphi 0, %s197
    %s200 = sphi 0, %s199
    %s214 = sphi 0, %s200
    %s218 = sphi 0, %s218
    %s220 = sphi 0, %s218
    %s221 = sphi 0, %s220
    %s235 = sphi 0, %s221
    %s241 = sphi 0, %s243
    %s244 = sphi 0, %s241
    %s245 = sphi 0, %s244
    %s261 = sphi 0, %s245
  $region4: #{group_forward.1} parent=0 // loop_header_branch
    %19 = sbr.rel (%p17) target = $region8
  $region5: #{group_forward.1} parent=0 // loop_body
    %s21 = ssub.s32 %s16, 1
    %s22 = ssub.s32 %s16, 2
    %s23 = sadd.s32 %s16, 1
    %s24 = ssub.s32 %s16, %s23
    %p25 = scmp.eq.s32.totalorder %s24, 0
    %s27 = sadd.s32 %s26, 1
    %s28 = scalar_select %p25, %s26, %s27
    %p31 = pneg %p25
    %p32 = scmp.eq.s32.totalorder %s16, 1
    %p33 = por %p31, %p32
    %p34 = scmp.ne.s32.totalorder %s26, %s29
    %p35 = scmp.eq.s32.totalorder %s16, 0
    %p36 = por %p34, %p35
    %p37 = scmp.ne.s32.totalorder %s26, %s29
    %p38 = scmp.eq.s32.totalorder %s21, 1
    %p39 = por %p37, %p38
    %p40 = scmp.ne.s32.totalorder %s29, %s30
    %p41 = scmp.eq.s32.totalorder %s21, 0
    %p42 = por %p40, %p41
    %p43 = scmp.ne.s32.totalorder %s29, %s30
    %p44 = scmp.eq.s32.totalorder %s22, 1
    %p45 = por %p43, %p44
    %p47 = scmp.ne.s32.totalorder %s30, %s46
    %p48 = scmp.eq.s32.totalorder %s22, 0
    %p49 = por %p47, %p48
    %s51 = sadd.s32 %s50, 1
    %p54 = scmp.eq.s32.totalorder %s16, 1
    %p55 = scmp.ne.s32.totalorder %s50, %s52
    %p56 = scmp.eq.s32.totalorder %s16, 0
    %p57 = por %p55, %p56
    %p58 = scmp.ne.s32.totalorder %s50, %s52
    %p59 = scmp.eq.s32.totalorder %s21, 1
    %p60 = por %p58, %p59
    %p61 = scmp.ne.s32.totalorder %s52, %s53
    %p62 = scmp.eq.s32.totalorder %s21, 0
    %p63 = por %p61, %p62
    %p64 = scmp.ne.s32.totalorder %s52, %s53
    %p65 = scmp.eq.s32.totalorder %s22, 1
    %p66 = por %p64, %p65
    %p68 = scmp.ne.s32.totalorder %s53, %s67
    %p69 = scmp.eq.s32.totalorder %s22, 0
    %p70 = por %p68, %p69
    %s72 = sadd.s32 %s71, 1
    %p75 = scmp.eq.s32.totalorder %s16, 1
    %p76 = scmp.ne.s32.totalorder %s71, %s73
    %p77 = scmp.eq.s32.totalorder %s16, 0
    %p78 = por %p76, %p77
    %p79 = scmp.ne.s32.totalorder %s71, %s73
    %p80 = scmp.eq.s32.totalorder %s21, 1
    %p81 = por %p79, %p80
    %p82 = scmp.ne.s32.totalorder %s73, %s74
    %p83 = scmp.eq.s32.totalorder %s21, 0
    %p84 = por %p82, %p83
    %p85 = scmp.ne.s32.totalorder %s73, %s74
    %p86 = scmp.eq.s32.totalorder %s22, 1
    %p87 = por %p85, %p86
    %p89 = scmp.ne.s32.totalorder %s74, %s88
    %p90 = scmp.eq.s32.totalorder %s22, 0
    %p91 = por %p89, %p90
    %s93 = sadd.s32 %s92, 1
    %p96 = scmp.eq.s32.totalorder %s16, 1
    %p97 = scmp.ne.s32.totalorder %s92, %s94
    %p98 = scmp.eq.s32.totalorder %s16, 0
    %p99 = por %p97, %p98
    %p100 = scmp.ne.s32.totalorder %s92, %s94
    %p101 = scmp.eq.s32.totalorder %s21, 1
    %p102 = por %p100, %p101
    %p103 = scmp.ne.s32.totalorder %s94, %s95
    %p104 = scmp.eq.s32.totalorder %s21, 0
    %p105 = por %p103, %p104
    %p106 = scmp.ne.s32.totalorder %s94, %s95
    %p107 = scmp.eq.s32.totalorder %s22, 1
    %p108 = por %p106, %p107
    %p110 = scmp.ne.s32.totalorder %s95, %s109
    %p111 = scmp.eq.s32.totalorder %s22, 0
    %p112 = por %p110, %p111
    %s114 = sadd.s32 %s113, 1
    %p117 = scmp.eq.s32.totalorder %s16, 1
    %p118 = scmp.ne.s32.totalorder %s113, %s115
    %p119 = scmp.eq.s32.totalorder %s16, 0
    %p120 = por %p118, %p119
    %p121 = scmp.ne.s32.totalorder %s113, %s115
    %p122 = scmp.eq.s32.totalorder %s21, 1
    %p123 = por %p121, %p122
    %p124 = scmp.ne.s32.totalorder %s115, %s116
    %p125 = scmp.eq.s32.totalorder %s21, 0
    %p126 = por %p124, %p125
    %p127 = scmp.ne.s32.totalorder %s115, %s116
    %p128 = scmp.eq.s32.totalorder %s22, 1
    %p129 = por %p127, %p128
    %p131 = scmp.ne.s32.totalorder %s116, %s130
    %p132 = scmp.eq.s32.totalorder %s22, 0
    %p133 = por %p131, %p132
    %s135 = sadd.s32 %s134, 1
    %p138 = scmp.eq.s32.totalorder %s16, 1
    %p139 = scmp.ne.s32.totalorder %s134, %s136
    %p140 = scmp.eq.s32.totalorder %s16, 0
    %p141 = por %p139, %p140
    %p142 = scmp.ne.s32.totalorder %s134, %s136
    %p143 = scmp.eq.s32.totalorder %s21, 1
    %p144 = por %p142, %p143
    %p145 = scmp.ne.s32.totalorder %s136, %s137
    %p146 = scmp.eq.s32.totalorder %s21, 0
    %p147 = por %p145, %p146
    %p148 = scmp.ne.s32.totalorder %s136, %s137
    %p149 = scmp.eq.s32.totalorder %s22, 1
    %p150 = por %p148, %p149
    %p152 = scmp.ne.s32.totalorder %s137, %s151
    %p153 = scmp.eq.s32.totalorder %s22, 0
    %p154 = por %p152, %p153
    %s156 = sadd.s32 %s155, 1
    %p159 = scmp.eq.s32.totalorder %s16, 1
    %p160 = scmp.ne.s32.totalorder %s155, %s157
    %p161 = scmp.eq.s32.totalorder %s16, 0
    %p162 = por %p160, %p161
    %p163 = scmp.ne.s32.totalorder %s155, %s157
    %p164 = scmp.eq.s32.totalorder %s21, 1
    %p165 = por %p163, %p164
    %p166 = scmp.ne.s32.totalorder %s157, %s158
    %p167 = scmp.eq.s32.totalorder %s21, 0
    %p168 = por %p166, %p167
    %p169 = scmp.ne.s32.totalorder %s157, %s158
    %p170 = scmp.eq.s32.totalorder %s22, 1
    %p171 = por %p169, %p170
    %p173 = scmp.ne.s32.totalorder %s158, %s172
    %p174 = scmp.eq.s32.totalorder %s22, 0
    %p175 = por %p173, %p174
    %s177 = sadd.s32 %s176, 1
    %p180 = scmp.eq.s32.totalorder %s16, 1
    %p181 = scmp.ne.s32.totalorder %s176, %s178
    %p182 = scmp.eq.s32.totalorder %s16, 0
    %p183 = por %p181, %p182
    %p184 = scmp.ne.s32.totalorder %s176, %s178
    %p185 = scmp.eq.s32.totalorder %s21, 1
    %p186 = por %p184, %p185
    %p187 = scmp.ne.s32.totalorder %s178, %s179
    %p188 = scmp.eq.s32.totalorder %s21, 0
    %p189 = por %p187, %p188
    %p190 = scmp.ne.s32.totalorder %s178, %s179
    %p191 = scmp.eq.s32.totalorder %s22, 1
    %p192 = por %p190, %p191
    %p194 = scmp.ne.s32.totalorder %s179, %s193
    %p195 = scmp.eq.s32.totalorder %s22, 0
    %p196 = por %p194, %p195
    %s198 = sadd.s32 %s197, 1
    %p201 = scmp.eq.s32.totalorder %s16, 1
    %p202 = scmp.ne.s32.totalorder %s197, %s199
    %p203 = scmp.eq.s32.totalorder %s16, 0
    %p204 = por %p202, %p203
    %p205 = scmp.ne.s32.totalorder %s197, %s199
    %p206 = scmp.eq.s32.totalorder %s21, 1
    %p207 = por %p205, %p206
    %p208 = scmp.ne.s32.totalorder %s199, %s200
    %p209 = scmp.eq.s32.totalorder %s21, 0
    %p210 = por %p208, %p209
    %p211 = scmp.ne.s32.totalorder %s199, %s200
    %p212 = scmp.eq.s32.totalorder %s22, 1
    %p213 = por %p211, %p212
    %p215 = scmp.ne.s32.totalorder %s200, %s214
    %p216 = scmp.eq.s32.totalorder %s22, 0
    %p217 = por %p215, %p216
    %s219 = sadd.s32 %s218, 1
    %p222 = scmp.eq.s32.totalorder %s16, 1
    %p223 = scmp.ne.s32.totalorder %s218, %s220
    %p224 = scmp.eq.s32.totalorder %s16, 0
    %p225 = por %p223, %p224
    %p226 = scmp.ne.s32.totalorder %s218, %s220
    %p227 = scmp.eq.s32.totalorder %s21, 1
    %p228 = por %p226, %p227
    %p229 = scmp.ne.s32.totalorder %s220, %s221
    %p230 = scmp.eq.s32.totalorder %s21, 0
    %p231 = por %p229, %p230
    %p232 = scmp.ne.s32.totalorder %s220, %s221
    %p233 = scmp.eq.s32.totalorder %s22, 1
    %p234 = por %p232, %p233
    %p236 = scmp.ne.s32.totalorder %s221, %s235
    %p237 = scmp.eq.s32.totalorder %s22, 0
    %p238 = por %p236, %p237
    %s239 = ssub.s32 %s16, %s23
    %p240 = scmp.eq.s32.totalorder %s239, 0
    %s242 = sadd.s32 %s241, 1
    %s243 = scalar_select %p240, %s241, %s242
    %p246 = pneg %p240
    %p247 = scmp.eq.s32.totalorder %s16, 1
    %p248 = por %p246, %p247
    %p249 = scmp.ne.s32.totalorder %s241, %s244
    %p250 = scmp.eq.s32.totalorder %s16, 0
    %p251 = por %p249, %p250
    %p252 = scmp.ne.s32.totalorder %s241, %s244
    %p253 = scmp.eq.s32.totalorder %s21, 1
    %p254 = por %p252, %p253
    %p255 = scmp.ne.s32.totalorder %s244, %s245
    %p256 = scmp.eq.s32.totalorder %s21, 0
    %p257 = por %p255, %p256
    %p258 = scmp.ne.s32.totalorder %s244, %s245
    %p259 = scmp.eq.s32.totalorder %s22, 1
    %p260 = por %p258, %p259
    %p262 = scmp.ne.s32.totalorder %s245, %s261
    %p263 = scmp.eq.s32.totalorder %s22, 0
    %p264 = por %p262, %p263
    %p265 = scmp.le.s32.totalorder 1, %s16
    %p266 = scmp.lt.s32.totalorder %s16, 3
    %p267 = pnand %p265, %p266
    %p268 = pneg %p267
    // Predicated region
    $region9: #{group_forward.1} parent=5 // pred_check
      _
    $region10: #{group_forward.1} parent=5 // pred_check_branch
      %270 = sbr.rel (%p267) target = $region12
    $region11: #{group_forward.1} parent=5 // pred_region
      %s271 = ssub.s32 %s16, 1
      // Predicated region
      $region13: #{group_forward.1} parent=11 // pred_check
        %p272 = pneg %p63
      $region14: #{group_forward.1} parent=11 // pred_check_branch
        %274 = sbr.rel (%p272) target = $region16
      $region15: #{group_forward.1} parent=11 // pred_region
        _
      $region16: #{group_forward.1} parent=11 // pred_fallthru
        _
      // Predicated region
      $region17: #{group_forward.1} parent=11 // pred_check
        %p275 = pneg %p84
      $region18: #{group_forward.1} parent=11 // pred_check_branch
        %277 = sbr.rel (%p275) target = $region20
      $region19: #{group_forward.1} parent=11 // pred_region
        _
      $region20: #{group_forward.1} parent=11 // pred_fallthru
        _
      // Predicated region
      $region21: #{group_forward.1} parent=11 // pred_check
        %p278 = pneg %p105
      $region22: #{group_forward.1} parent=11 // pred_check_branch
        %280 = sbr.rel (%p278) target = $region24
      $region23: #{group_forward.1} parent=11 // pred_region
        _
      $region24: #{group_forward.1} parent=11 // pred_fallthru
        _
      // Predicated region
      $region25: #{group_forward.1} parent=11 // pred_check
        %p281 = pneg %p126
      $region26: #{group_forward.1} parent=11 // pred_check_branch
        %283 = sbr.rel (%p281) target = $region28
      $region27: #{group_forward.1} parent=11 // pred_region
        _
      $region28: #{group_forward.1} parent=11 // pred_fallthru
        _
      // Predicated region
      $region29: #{group_forward.1} parent=11 // pred_check
        %p284 = pneg %p147
      $region30: #{group_forward.1} parent=11 // pred_check_branch
        %286 = sbr.rel (%p284) target = $region32
      $region31: #{group_forward.1} parent=11 // pred_region
        _
      $region32: #{group_forward.1} parent=11 // pred_fallthru
        _
      // Predicated region
      $region33: #{group_forward.1} parent=11 // pred_check
        %p287 = pneg %p168
      $region34: #{group_forward.1} parent=11 // pred_check_branch
        %289 = sbr.rel (%p287) target = $region36
      $region35: #{group_forward.1} parent=11 // pred_region
        _
      $region36: #{group_forward.1} parent=11 // pred_fallthru
        _
      // Predicated region
      $region37: #{group_forward.1} parent=11 // pred_check
        %p290 = pneg %p189
      $region38: #{group_forward.1} parent=11 // pred_check_branch
        %292 = sbr.rel (%p290) target = $region40
      $region39: #{group_forward.1} parent=11 // pred_region
        _
      $region40: #{group_forward.1} parent=11 // pred_fallthru
        _
      // Predicated region
      $region41: #{group_forward.1} parent=11 // pred_check
        %p293 = pneg %p210
      $region42: #{group_forward.1} parent=11 // pred_check_branch
        %295 = sbr.rel (%p293) target = $region44
      $region43: #{group_forward.1} parent=11 // pred_region
        _
      $region44: #{group_forward.1} parent=11 // pred_fallthru
        _
      // Predicated region
      $region45: #{group_forward.1} parent=11 // pred_check
        %p296 = pneg %p231
      $region46: #{group_forward.1} parent=11 // pred_check_branch
        %298 = sbr.rel (%p296) target = $region48
      $region47: #{group_forward.1} parent=11 // pred_region
        _
      $region48: #{group_forward.1} parent=11 // pred_fallthru
        _
    $region12: #{group_forward.1} parent=5 // pred_fallthru
      _
    %p299 = scmp.lt.s32.totalorder %s16, 2
    // Predicated region
    $region49: #{group_forward.1} parent=5 // pred_check
      %p300 = pneg %p299
    $region50: #{group_forward.1} parent=5 // pred_check_branch
      %302 = sbr.rel (%p300) target = $region52
    $region51: #{group_forward.1} parent=5 // pred_region
      // Predicated region
      $region53: #{group_forward.1} parent=51 // pred_check
        %p303 = pneg %p36
      $region54: #{group_forward.1} parent=51 // pred_check_branch
        %305 = sbr.rel (%p303) target = $region56
      $region55: #{group_forward.1} parent=51 // pred_region
        %p306 = scmp.lt.s32.totalorder %s16, 1
        %s307 = scalar_select %p306, %s16, 1
        %s308 = smul.addr %s307, 2
        %s309 = smul.addr %s308, 8
        %s310 = scalar_lea.vmem %s0, %s309
      $region56: #{group_forward.1} parent=51 // pred_fallthru
        _
    $region52: #{group_forward.1} parent=5 // pred_fallthru
      _
    %p311 = scmp.le.s32.totalorder 1, %s16
    %p312 = scmp.lt.s32.totalorder %s16, 3
    %p313 = pnand %p311, %p312
    %p314 = pneg %p313
    // Predicated region
    $region57: #{group_forward.1} parent=5 // pred_check
      _
    $region58: #{group_forward.1} parent=5 // pred_check_branch
      %316 = sbr.rel (%p313) target = $region60
    $region59: #{group_forward.1} parent=5 // pred_region
      %s317 = ssub.s32 %s16, 1
      %p318 = scmp.lt.s32.totalorder %s21, 1
      %s319 = scalar_select %p318, %s21, 1
      %s320 = smul.addr %s319, 2
      %s321 = smul.addr %s320, 8
      %s322 = scalar_lea.vmem %s0, %s321
      %p323 = pneg %p42
      %p324 = pneg %p39
      %p325 = pneg %p63
      %p326 = pneg %p60
      %p327 = pneg %p84
      %p328 = pneg %p81
      %p329 = pneg %p105
      %p330 = pneg %p102
      %p331 = pneg %p126
      %p332 = pneg %p123
      %p333 = pneg %p147
      %p334 = pneg %p144
      %p335 = pneg %p168
      %p336 = pneg %p165
      %p337 = pneg %p189
      %p338 = pneg %p186
      %p339 = pneg %p210
      %p340 = pneg %p207
      %p341 = pneg %p231
      %p342 = pneg %p228
      %p343 = pneg %p257
      %p344 = pneg %p254
      %p345 = scmp.lt.s32.totalorder %s21, 1
      %s346 = scalar_select %p345, %s21, 1
      %s347 = smul.addr %s346, 2
      %s348 = smul.addr %s347, 8
      %s349 = scalar_lea.vmem %s10, %s348
      %p350 = scmp.lt.s32.totalorder %s21, 1
      %s351 = scalar_select %p350, %s21, 1
      %s352 = smul.addr %s351, 2
      %s353 = smul.addr %s352, 8
      %s354 = scalar_lea.vmem %s0, %s353
      %p355 = scmp.lt.s32.totalorder %s21, 1
      %s356 = scalar_select %p355, %s21, 1
      %s357 = smul.addr %s356, 2
      %s358 = smul.addr %s357, 8
      %s359 = scalar_lea.vmem %s10, %s358
      %v360 = vld [vmem:[%s354] sm:$0xff]
      %v361 = vld [vmem:[%s354 + $0x8] sm:$0xff]
      %362 = vrot.lane.b32.xlu0 %v360, 17
      %v363 = vpop.permute.xlu0 %362
      %364 = vrot.lane.b32.xlu0 %v361, 17
      %v365 = vpop.permute.xlu0 %364
      %v366 = vlaneseq
      %v367 = vand.u32 %v366, 127
      %vm368 = vcmp.lt.s32.totalorder %v367, 17
      %v369 = vsel %vm368, %v363, %v365
      %v370 = vsel %vm368, %v365, %v363
      %v371 = vld [vmem:[%s1] ss:$8 sm:$0x3]
      %v373 = vlaneseq
      %v374 = vshrl.u32 %v373, 7
      %v375 = vsub.s32 0, %v374
      %v376 = vrot.slane %v371, %v375
      %v377 = vlaneseq
      %v378 = vshrl.u32 %v377, 7
      %v379 = vsub.s32 1, %v378
      %v380 = vrot.slane %v371, %v379
      %v383 = vmul.f32 %v370, %v376
      %v384 = vmul.f32 %v369, %v380
      %385 = vrot.lane.b32.xlu0 %v360, 16
      %v386 = vpop.permute.xlu0 %385
      %387 = vrot.lane.b32.xlu0 %v361, 16
      %v388 = vpop.permute.xlu0 %387
      %vm389 = vcmp.lt.s32.totalorder %v367, 16
      %v390 = vsel %vm389, %v386, %v388
      %v391 = vsel %vm389, %v388, %v386
      %s392 = scalar_lea.vmem %s1, 1
      %v393 = vld [vmem:[%s392] ss:$8 sm:$0x3]
      %v395 = vlaneseq
      %v396 = vshrl.u32 %v395, 7
      %v397 = vsub.s32 0, %v396
      %v398 = vrot.slane %v393, %v397
      %v399 = vlaneseq
      %v400 = vshrl.u32 %v399, 7
      %v401 = vsub.s32 1, %v400
      %v402 = vrot.slane %v393, %v401
      %v405 = vmul.f32 %v391, %v398
      %v406 = vmul.f32 %v390, %v402
      %407 = vrot.lane.b32.xlu0 %v360, 15
      %v408 = vpop.permute.xlu0 %407
      %409 = vrot.lane.b32.xlu0 %v361, 15
      %v410 = vpop.permute.xlu0 %409
      %vm411 = vcmp.lt.s32.totalorder %v367, 15
      %v412 = vsel %vm411, %v408, %v410
      %v413 = vsel %vm411, %v410, %v408
      %s414 = scalar_lea.vmem %s1, 2
      %v415 = vld [vmem:[%s414] ss:$8 sm:$0x3]
      %v417 = vlaneseq
      %v418 = vshrl.u32 %v417, 7
      %v419 = vsub.s32 0, %v418
      %v420 = vrot.slane %v415, %v419
      %v421 = vlaneseq
      %v422 = vshrl.u32 %v421, 7
      %v423 = vsub.s32 1, %v422
      %v424 = vrot.slane %v415, %v423
      %v427 = vmul.f32 %v413, %v420
      %v428 = vmul.f32 %v412, %v424
      %429 = vrot.lane.b32.xlu0 %v360, 1
      %v430 = vpop.permute.xlu0 %429
      %431 = vrot.lane.b32.xlu0 %v361, 1
      %v432 = vpop.permute.xlu0 %431
      %vm433 = vcmp.lt.s32.totalorder %v367, 1
      %v434 = vsel %vm433, %v430, %v432
      %v435 = vsel %vm433, %v432, %v430
      %s436 = scalar_lea.vmem %s1, 3
      %v437 = vld [vmem:[%s436] ss:$8 sm:$0x3]
      %v439 = vlaneseq
      %v440 = vshrl.u32 %v439, 7
      %v441 = vsub.s32 0, %v440
      %v442 = vrot.slane %v437, %v441
      %v443 = vlaneseq
      %v444 = vshrl.u32 %v443, 7
      %v445 = vsub.s32 1, %v444
      %v446 = vrot.slane %v437, %v445
      %v449 = vmul.f32 %v435, %v442
      %v450 = vmul.f32 %v434, %v446
      %451 = vrot.lane.b32.xlu0 %v360, 127
      %v452 = vpop.permute.xlu0 %451
      %453 = vrot.lane.b32.xlu0 %v361, 127
      %v454 = vpop.permute.xlu0 %453
      %vm455 = vcmp.lt.s32.totalorder %v367, 127
      %v456 = vsel %vm455, %v452, %v454
      %v457 = vsel %vm455, %v454, %v452
      %s458 = scalar_lea.vmem %s1, 5
      %v459 = vld [vmem:[%s458] ss:$8 sm:$0x3]
      %v461 = vlaneseq
      %v462 = vshrl.u32 %v461, 7
      %v463 = vsub.s32 0, %v462
      %v464 = vrot.slane %v459, %v463
      %v465 = vlaneseq
      %v466 = vshrl.u32 %v465, 7
      %v467 = vsub.s32 1, %v466
      %v468 = vrot.slane %v459, %v467
      %v471 = vmul.f32 %v456, %v464
      %v472 = vmul.f32 %v457, %v468
      %473 = vrot.lane.b32.xlu0 %v360, 113
      %v474 = vpop.permute.xlu0 %473
      %475 = vrot.lane.b32.xlu0 %v361, 113
      %v476 = vpop.permute.xlu0 %475
      %vm477 = vcmp.lt.s32.totalorder %v367, 113
      %v478 = vsel %vm477, %v474, %v476
      %v479 = vsel %vm477, %v476, %v474
      %s480 = scalar_lea.vmem %s1, 6
      %v481 = vld [vmem:[%s480] ss:$8 sm:$0x3]
      %v483 = vlaneseq
      %v484 = vshrl.u32 %v483, 7
      %v485 = vsub.s32 0, %v484
      %v486 = vrot.slane %v481, %v485
      %v487 = vlaneseq
      %v488 = vshrl.u32 %v487, 7
      %v489 = vsub.s32 1, %v488
      %v490 = vrot.slane %v481, %v489
      %v493 = vmul.f32 %v478, %v486
      %v494 = vmul.f32 %v479, %v490
      %495 = vrot.lane.b32.xlu0 %v360, 112
      %v496 = vpop.permute.xlu0 %495
      %497 = vrot.lane.b32.xlu0 %v361, 112
      %v498 = vpop.permute.xlu0 %497
      %vm499 = vcmp.lt.s32.totalorder %v367, 112
      %v500 = vsel %vm499, %v496, %v498
      %v501 = vsel %vm499, %v498, %v496
      %s502 = scalar_lea.vmem %s1, 7
      %v503 = vld [vmem:[%s502] ss:$8 sm:$0x3]
      %v505 = vlaneseq
      %v506 = vshrl.u32 %v505, 7
      %v507 = vsub.s32 0, %v506
      %v508 = vrot.slane %v503, %v507
      %v509 = vlaneseq
      %v510 = vshrl.u32 %v509, 7
      %v511 = vsub.s32 1, %v510
      %v512 = vrot.slane %v503, %v511
      %v515 = vmul.f32 %v500, %v508
      %v516 = vmul.f32 %v501, %v512
      %517 = vrot.lane.b32.xlu0 %v360, 111
      %v518 = vpop.permute.xlu0 %517
      %519 = vrot.lane.b32.xlu0 %v361, 111
      %v520 = vpop.permute.xlu0 %519
      %vm521 = vcmp.lt.s32.totalorder %v367, 111
      %v522 = vsel %vm521, %v518, %v520
      %v523 = vsel %vm521, %v520, %v518
      %s524 = scalar_lea.vmem %s1, 16
      %v525 = vld [vmem:[%s524] ss:$8 sm:$0x3]
      %v527 = vlaneseq
      %v528 = vshrl.u32 %v527, 7
      %v529 = vsub.s32 0, %v528
      %v530 = vrot.slane %v525, %v529
      %v531 = vlaneseq
      %v532 = vshrl.u32 %v531, 7
      %v533 = vsub.s32 1, %v532
      %v534 = vrot.slane %v525, %v533
      %v537 = vmul.f32 %v522, %v530
      %v538 = vmul.f32 %v523, %v534
      %v539 = vld [vmem:[%s2] sm:$0xff]
      %v540 = vld [vmem:[%s3] sm:$0xff]
      %542 = vset.pattern.permute.xlu0 0
      %543 = vperm.xlu0 %542, %v540
      %v544 = vpop.permute.xlu0 %543
      %vm546 = vcmask 588800
      %v548 = vsel %vm546, %v539, 0
      %550 = vmatprep.subr.mxu0 0.0
      %551 = vmatpush1.msra.mxu0 0.0
      %552 = vmatprep.subr.mxu0 0.0
      %553 = vmatpush1.msra.mxu0 0.0
      %554 = vmatprep.subr.mxu0 0.0
      %555 = vmatpush1.msra.mxu0 0.0
      %556 = vmatprep.subr.mxu0 0.0
      %557 = vmatpush1.msra.mxu0 0.0
      %558 = vmatprep.subr.mxu0 0.0
      %559 = vmatpush1.msra.mxu0 0.0
      %560 = vmatprep.subr.mxu0 0.0
      %561 = vmatpush1.msra.mxu0 0.0
      %562 = vmatprep.subr.mxu0 0.0
      %563 = vmatpush1.msra.mxu0 0.0
      %564 = vmatprep.subr.mxu0 %v538
      %565 = vmatpush1.msra.mxu0 %v537
      %566 = vmatprep.subr.mxu0 %v516
      %567 = vmatpush1.msra.mxu0 %v515
      %568 = vmatprep.subr.mxu0 %v494
      %569 = vmatpush1.msra.mxu0 %v493
      %570 = vmatprep.subr.mxu0 %v472
      %571 = vmatpush1.msra.mxu0 %v471
      %572 = vmatprep.subr.mxu0 %v361
      %573 = vmatpush1.msra.mxu0 %v360
      %574 = vmatprep.subr.mxu0 %v450
      %575 = vmatpush1.msra.mxu0 %v449
      %576 = vmatprep.subr.mxu0 %v428
      %577 = vmatpush1.msra.mxu0 %v427
      %578 = vmatprep.subr.mxu0 %v406
      %579 = vmatpush1.msra.mxu0 %v405
      %580 = vmatprep.subr.mxu0 %v384
      %581 = vmatpush1.msra.mxu0 %v383
      %582 = vmatprep.subr.mxu0 0.0
      %583 = vmatpush2.msra.mxu0 0.0
      %584 = vmatprep.subr.mxu0 0.0
      %585 = vmatpush2.msra.mxu0 0.0
      %586 = vmatprep.subr.mxu0 0.0
      %587 = vmatpush2.msra.mxu0 0.0
      %588 = vmatprep.subr.mxu0 0.0
      %589 = vmatpush2.msra.mxu0 0.0
      %590 = vmatprep.subr.mxu0 0.0
      %591 = vmatpush2.msra.mxu0 0.0
      %592 = vmatprep.subr.mxu0 0.0
      %593 = vmatpush2.msra.mxu0 0.0
      %594 = vmatprep.subr.mxu0 0.0
      %595 = vmatpush2.msra.mxu0 0.0
      %596 = vmatprep.subr.mxu0 0.0
      %597 = vmatpush2.msra.mxu0 0.0
      %598 = vmatprep.subr.mxu0 0.0
      %599 = vmatpush2.msra.mxu0 0.0
      %600 = vmatprep.subr.mxu0 0.0
      %601 = vmatpush2.msra.mxu0 0.0
      %602 = vmatprep.subr.mxu0 0.0
      %603 = vmatpush2.msra.mxu0 0.0
      %604 = vmatprep.subr.mxu0 0.0
      %605 = vmatpush2.msra.mxu0 0.0
      %606 = vmatprep.subr.mxu0 0.0
      %607 = vmatpush2.msra.mxu0 0.0
      %608 = vmatprep.subr.mxu0 0.0
      %609 = vmatpush2.msra.mxu0 0.0
      %610 = vmatprep.subr.mxu0 0.0
      %611 = vmatpush2.msra.mxu0 0.0
      %612 = vmatprep.subr.mxu0 0.0
      %613 = vmatpush2.msra.mxu0 0.0
      %614 = vmatprep.mubr.f32.mxu0 0.0
      %615 = vmatmul.mubr.f32.gmra.mxu0 %v548
      %v616 = vpop.f32.mrf.mxu0
      %v617 = vadd.f32 %v544, %v616
      %v618 = vpop.f32.mrf.mxu0
      %v619 = vadd.f32 %v544, %v618
      %620 = vdwg.mxu0
      %vm621 = vcmp.ge.f32.partialorder %v617, 0.0
      %vm622 = vcmp.ge.f32.partialorder %v619, 0.0
      %v623 = vmul.f32 %v617, 0.01
      %v624 = vmul.f32 %v619, 0.01
      %v625 = vsel %vm621, %v617, %v623
      %v626 = vsel %vm622, %v619, %v624
      %627 = vrot.lane.b32.xlu0 %v625, 17
      %v628 = vpop.permute.xlu0 %627
      %629 = vrot.lane.b32.xlu0 %v626, 17
      %v630 = vpop.permute.xlu0 %629
      %v631 = vsel %vm368, %v628, %v630
      %v632 = vsel %vm368, %v630, %v628
      %v633 = vmul.f32 %v632, %v376
      %v634 = vmul.f32 %v631, %v380
      %635 = vrot.lane.b32.xlu0 %v625, 16
      %v636 = vpop.permute.xlu0 %635
      %637 = vrot.lane.b32.xlu0 %v626, 16
      %v638 = vpop.permute.xlu0 %637
      %v639 = vsel %vm389, %v636, %v638
      %v640 = vsel %vm389, %v638, %v636
      %v641 = vmul.f32 %v640, %v398
      %v642 = vmul.f32 %v639, %v402
      %643 = vrot.lane.b32.xlu0 %v625, 15
      %v644 = vpop.permute.xlu0 %643
      %645 = vrot.lane.b32.xlu0 %v626, 15
      %v646 = vpop.permute.xlu0 %645
      %v647 = vsel %vm411, %v644, %v646
      %v648 = vsel %vm411, %v646, %v644
      %v649 = vmul.f32 %v648, %v420
      %v650 = vmul.f32 %v647, %v424
      %651 = vrot.lane.b32.xlu0 %v625, 1
      %v652 = vpop.permute.xlu0 %651
      %653 = vrot.lane.b32.xlu0 %v626, 1
      %v654 = vpop.permute.xlu0 %653
      %v655 = vsel %vm433, %v652, %v654
      %v656 = vsel %vm433, %v654, %v652
      %v657 = vmul.f32 %v656, %v442
      %v658 = vmul.f32 %v655, %v446
      %659 = vrot.lane.b32.xlu0 %v625, 127
      %v660 = vpop.permute.xlu0 %659
      %661 = vrot.lane.b32.xlu0 %v626, 127
      %v662 = vpop.permute.xlu0 %661
      %v663 = vsel %vm455, %v660, %v662
      %v664 = vsel %vm455, %v662, %v660
      %v665 = vmul.f32 %v663, %v464
      %v666 = vmul.f32 %v664, %v468
      %667 = vrot.lane.b32.xlu0 %v625, 113
      %v668 = vpop.permute.xlu0 %667
      %669 = vrot.lane.b32.xlu0 %v626, 113
      %v670 = vpop.permute.xlu0 %669
      %v671 = vsel %vm477, %v668, %v670
      %v672 = vsel %vm477, %v670, %v668
      %v673 = vmul.f32 %v671, %v486
      %v674 = vmul.f32 %v672, %v490
      %675 = vrot.lane.b32.xlu0 %v625, 112
      %v676 = vpop.permute.xlu0 %675
      %677 = vrot.lane.b32.xlu0 %v626, 112
      %v678 = vpop.permute.xlu0 %677
      %v679 = vsel %vm499, %v676, %v678
      %v680 = vsel %vm499, %v678, %v676
      %v681 = vmul.f32 %v679, %v508
      %v682 = vmul.f32 %v680, %v512
      %683 = vrot.lane.b32.xlu0 %v625, 111
      %v684 = vpop.permute.xlu0 %683
      %685 = vrot.lane.b32.xlu0 %v626, 111
      %v686 = vpop.permute.xlu0 %685
      %v687 = vsel %vm521, %v684, %v686
      %v688 = vsel %vm521, %v686, %v684
      %v689 = vmul.f32 %v687, %v530
      %v690 = vmul.f32 %v688, %v534
      %v691 = vld [vmem:[%s4] sm:$0xff]
      %v692 = vld [vmem:[%s5] sm:$0xff]
      %694 = vset.pattern.permute.xlu0 0
      %695 = vperm.xlu0 %694, %v692
      %v696 = vpop.permute.xlu0 %695
      %vm698 = vcmask 654336
      %v700 = vsel %vm698, %v691, 0
      %702 = vmatprep.subr.mxu0 0.0
      %703 = vmatpush1.msra.mxu0 0.0
      %704 = vmatprep.subr.mxu0 0.0
      %705 = vmatpush1.msra.mxu0 0.0
      %706 = vmatprep.subr.mxu0 0.0
      %707 = vmatpush1.msra.mxu0 0.0
      %708 = vmatprep.subr.mxu0 0.0
      %709 = vmatpush1.msra.mxu0 0.0
      %710 = vmatprep.subr.mxu0 0.0
      %711 = vmatpush1.msra.mxu0 0.0
      %712 = vmatprep.subr.mxu0 0.0
      %713 = vmatpush1.msra.mxu0 0.0
      %714 = vmatprep.subr.mxu0 %v361
      %715 = vmatpush1.msra.mxu0 %v360
      %716 = vmatprep.subr.mxu0 %v690
      %717 = vmatpush1.msra.mxu0 %v689
      %718 = vmatprep.subr.mxu0 %v682
      %719 = vmatpush1.msra.mxu0 %v681
      %720 = vmatprep.subr.mxu0 %v674
      %721 = vmatpush1.msra.mxu0 %v673
      %722 = vmatprep.subr.mxu0 %v666
      %723 = vmatpush1.msra.mxu0 %v665
      %724 = vmatprep.subr.mxu0 %v626
      %725 = vmatpush1.msra.mxu0 %v625
      %726 = vmatprep.subr.mxu0 %v658
      %727 = vmatpush1.msra.mxu0 %v657
      %728 = vmatprep.subr.mxu0 %v650
      %729 = vmatpush1.msra.mxu0 %v649
      %730 = vmatprep.subr.mxu0 %v642
      %731 = vmatpush1.msra.mxu0 %v641
      %732 = vmatprep.subr.mxu0 %v634
      %733 = vmatpush1.msra.mxu0 %v633
      %734 = vmatprep.subr.mxu0 0.0
      %735 = vmatpush2.msra.mxu0 0.0
      %736 = vmatprep.subr.mxu0 0.0
      %737 = vmatpush2.msra.mxu0 0.0
      %738 = vmatprep.subr.mxu0 0.0
      %739 = vmatpush2.msra.mxu0 0.0
      %740 = vmatprep.subr.mxu0 0.0
      %741 = vmatpush2.msra.mxu0 0.0
      %742 = vmatprep.subr.mxu0 0.0
      %743 = vmatpush2.msra.mxu0 0.0
      %744 = vmatprep.subr.mxu0 0.0
      %745 = vmatpush2.msra.mxu0 0.0
      %746 = vmatprep.subr.mxu0 0.0
      %747 = vmatpush2.msra.mxu0 0.0
      %748 = vmatprep.subr.mxu0 0.0
      %749 = vmatpush2.msra.mxu0 0.0
      %750 = vmatprep.subr.mxu0 0.0
      %751 = vmatpush2.msra.mxu0 0.0
      %752 = vmatprep.subr.mxu0 0.0
      %753 = vmatpush2.msra.mxu0 0.0
      %754 = vmatprep.subr.mxu0 0.0
      %755 = vmatpush2.msra.mxu0 0.0
      %756 = vmatprep.subr.mxu0 0.0
      %757 = vmatpush2.msra.mxu0 0.0
      %758 = vmatprep.subr.mxu0 0.0
      %759 = vmatpush2.msra.mxu0 0.0
      %760 = vmatprep.subr.mxu0 0.0
      %761 = vmatpush2.msra.mxu0 0.0
      %762 = vmatprep.subr.mxu0 0.0
      %763 = vmatpush2.msra.mxu0 0.0
      %764 = vmatprep.subr.mxu0 0.0
      %765 = vmatpush2.msra.mxu0 0.0
      %766 = vmatprep.mubr.f32.mxu0 0.0
      %767 = vmatmul.mubr.f32.gmra.mxu0 %v700
      %v768 = vpop.f32.mrf.mxu0
      %v769 = vadd.f32 %v696, %v768
      %v770 = vpop.f32.mrf.mxu0
      %v771 = vadd.f32 %v696, %v770
      %772 = vdwg.mxu0
      %vm773 = vcmp.ge.f32.partialorder %v769, 0.0
      %vm774 = vcmp.ge.f32.partialorder %v771, 0.0
      %v775 = vmul.f32 %v769, 0.01
      %v776 = vmul.f32 %v771, 0.01
      %v777 = vsel %vm773, %v769, %v775
      %v778 = vsel %vm774, %v771, %v776
      %779 = vrot.lane.b32.xlu0 %v777, 17
      %v780 = vpop.permute.xlu0 %779
      %781 = vrot.lane.b32.xlu0 %v778, 17
      %v782 = vpop.permute.xlu0 %781
      %v783 = vsel %vm368, %v780, %v782
      %v784 = vsel %vm368, %v782, %v780
      %v785 = vmul.f32 %v784, %v376
      %v786 = vmul.f32 %v783, %v380
      %787 = vrot.lane.b32.xlu0 %v777, 16
      %v788 = vpop.permute.xlu0 %787
      %789 = vrot.lane.b32.xlu0 %v778, 16
      %v790 = vpop.permute.xlu0 %789
      %v791 = vsel %vm389, %v788, %v790
      %v792 = vsel %vm389, %v790, %v788
      %v793 = vmul.f32 %v792, %v398
      %v794 = vmul.f32 %v791, %v402
      %795 = vrot.lane.b32.xlu0 %v777, 15
      %v796 = vpop.permute.xlu0 %795
      %797 = vrot.lane.b32.xlu0 %v778, 15
      %v798 = vpop.permute.xlu0 %797
      %v799 = vsel %vm411, %v796, %v798
      %v800 = vsel %vm411, %v798, %v796
      %v801 = vmul.f32 %v800, %v420
      %v802 = vmul.f32 %v799, %v424
      %803 = vrot.lane.b32.xlu0 %v777, 1
      %v804 = vpop.permute.xlu0 %803
      %805 = vrot.lane.b32.xlu0 %v778, 1
      %v806 = vpop.permute.xlu0 %805
      %v807 = vsel %vm433, %v804, %v806
      %v808 = vsel %vm433, %v806, %v804
      %v809 = vmul.f32 %v808, %v442
      %v810 = vmul.f32 %v807, %v446
      %811 = vrot.lane.b32.xlu0 %v777, 127
      %v812 = vpop.permute.xlu0 %811
      %813 = vrot.lane.b32.xlu0 %v778, 127
      %v814 = vpop.permute.xlu0 %813
      %v815 = vsel %vm455, %v812, %v814
      %v816 = vsel %vm455, %v814, %v812
      %v817 = vmul.f32 %v815, %v464
      %v818 = vmul.f32 %v816, %v468
      %819 = vrot.lane.b32.xlu0 %v777, 113
      %v820 = vpop.permute.xlu0 %819
      %821 = vrot.lane.b32.xlu0 %v778, 113
      %v822 = vpop.permute.xlu0 %821
      %v823 = vsel %vm477, %v820, %v822
      %v824 = vsel %vm477, %v822, %v820
      %v825 = vmul.f32 %v823, %v486
      %v826 = vmul.f32 %v824, %v490
      %827 = vrot.lane.b32.xlu0 %v777, 112
      %v828 = vpop.permute.xlu0 %827
      %829 = vrot.lane.b32.xlu0 %v778, 112
      %v830 = vpop.permute.xlu0 %829
      %v831 = vsel %vm499, %v828, %v830
      %v832 = vsel %vm499, %v830, %v828
      %v833 = vmul.f32 %v831, %v508
      %v834 = vmul.f32 %v832, %v512
      %835 = vrot.lane.b32.xlu0 %v777, 111
      %v836 = vpop.permute.xlu0 %835
      %837 = vrot.lane.b32.xlu0 %v778, 111
      %v838 = vpop.permute.xlu0 %837
      %v839 = vsel %vm521, %v836, %v838
      %v840 = vsel %vm521, %v838, %v836
      %v841 = vmul.f32 %v839, %v530
      %v842 = vmul.f32 %v840, %v534
      %v843 = vld [vmem:[%s6] sm:$0xff]
      %v844 = vld [vmem:[%s7] sm:$0xff]
      %846 = vset.pattern.permute.xlu0 0
      %847 = vperm.xlu0 %846, %v844
      %v848 = vpop.permute.xlu0 %847
      %v851 = vsel %vm546, %v843, 0
      %853 = vmatprep.subr.mxu0 0.0
      %854 = vmatpush1.msra.mxu0 0.0
      %855 = vmatprep.subr.mxu0 0.0
      %856 = vmatpush1.msra.mxu0 0.0
      %857 = vmatprep.subr.mxu0 0.0
      %858 = vmatpush1.msra.mxu0 0.0
      %859 = vmatprep.subr.mxu0 0.0
      %860 = vmatpush1.msra.mxu0 0.0
      %861 = vmatprep.subr.mxu0 0.0
      %862 = vmatpush1.msra.mxu0 0.0
      %863 = vmatprep.subr.mxu0 0.0
      %864 = vmatpush1.msra.mxu0 0.0
      %865 = vmatprep.subr.mxu0 0.0
      %866 = vmatpush1.msra.mxu0 0.0
      %867 = vmatprep.subr.mxu0 %v842
      %868 = vmatpush1.msra.mxu0 %v841
      %869 = vmatprep.subr.mxu0 %v834
      %870 = vmatpush1.msra.mxu0 %v833
      %871 = vmatprep.subr.mxu0 %v826
      %872 = vmatpush1.msra.mxu0 %v825
      %873 = vmatprep.subr.mxu0 %v818
      %874 = vmatpush1.msra.mxu0 %v817
      %875 = vmatprep.subr.mxu0 %v778
      %876 = vmatpush1.msra.mxu0 %v777
      %877 = vmatprep.subr.mxu0 %v810
      %878 = vmatpush1.msra.mxu0 %v809
      %879 = vmatprep.subr.mxu0 %v802
      %880 = vmatpush1.msra.mxu0 %v801
      %881 = vmatprep.subr.mxu0 %v794
      %882 = vmatpush1.msra.mxu0 %v793
      %883 = vmatprep.subr.mxu0 %v786
      %884 = vmatpush1.msra.mxu0 %v785
      %885 = vmatprep.subr.mxu0 0.0
      %886 = vmatpush2.msra.mxu0 0.0
      %887 = vmatprep.subr.mxu0 0.0
      %888 = vmatpush2.msra.mxu0 0.0
      %889 = vmatprep.subr.mxu0 0.0
      %890 = vmatpush2.msra.mxu0 0.0
      %891 = vmatprep.subr.mxu0 0.0
      %892 = vmatpush2.msra.mxu0 0.0
      %893 = vmatprep.subr.mxu0 0.0
      %894 = vmatpush2.msra.mxu0 0.0
      %895 = vmatprep.subr.mxu0 0.0
      %896 = vmatpush2.msra.mxu0 0.0
      %897 = vmatprep.subr.mxu0 0.0
      %898 = vmatpush2.msra.mxu0 0.0
      %899 = vmatprep.subr.mxu0 0.0
      %900 = vmatpush2.msra.mxu0 0.0
      %901 = vmatprep.subr.mxu0 0.0
      %902 = vmatpush2.msra.mxu0 0.0
      %903 = vmatprep.subr.mxu0 0.0
      %904 = vmatpush2.msra.mxu0 0.0
      %905 = vmatprep.subr.mxu0 0.0
      %906 = vmatpush2.msra.mxu0 0.0
      %907 = vmatprep.subr.mxu0 0.0
      %908 = vmatpush2.msra.mxu0 0.0
      %909 = vmatprep.subr.mxu0 0.0
      %910 = vmatpush2.msra.mxu0 0.0
      %911 = vmatprep.subr.mxu0 0.0
      %912 = vmatpush2.msra.mxu0 0.0
      %913 = vmatprep.subr.mxu0 0.0
      %914 = vmatpush2.msra.mxu0 0.0
      %915 = vmatprep.subr.mxu0 0.0
      %916 = vmatpush2.msra.mxu0 0.0
      %917 = vmatprep.mubr.f32.mxu0 0.0
      %918 = vmatmul.mubr.f32.gmra.mxu0 %v851
      %v919 = vpop.f32.mrf.mxu0
      %v920 = vadd.f32 %v848, %v919
      %v921 = vpop.f32.mrf.mxu0
      %v922 = vadd.f32 %v848, %v921
      %923 = vdwg.mxu0
      %vm924 = vcmp.ge.f32.partialorder %v920, 0.0
      %vm925 = vcmp.ge.f32.partialorder %v922, 0.0
      %v926 = vmul.f32 %v920, 0.01
      %v927 = vmul.f32 %v922, 0.01
      %v928 = vsel %vm924, %v920, %v926
      %v929 = vsel %vm925, %v922, %v927
      %930 = vrot.lane.b32.xlu0 %v928, 17
      %v931 = vpop.permute.xlu0 %930
      %932 = vrot.lane.b32.xlu0 %v929, 17
      %v933 = vpop.permute.xlu0 %932
      %v934 = vsel %vm368, %v931, %v933
      %v935 = vsel %vm368, %v933, %v931
      %v936 = vmul.f32 %v935, %v376
      %v937 = vmul.f32 %v934, %v380
      %938 = vrot.lane.b32.xlu0 %v928, 16
      %v939 = vpop.permute.xlu0 %938
      %940 = vrot.lane.b32.xlu0 %v929, 16
      %v941 = vpop.permute.xlu0 %940
      %v942 = vsel %vm389, %v939, %v941
      %v943 = vsel %vm389, %v941, %v939
      %v944 = vmul.f32 %v943, %v398
      %v945 = vmul.f32 %v942, %v402
      %946 = vrot.lane.b32.xlu0 %v928, 15
      %v947 = vpop.permute.xlu0 %946
      %948 = vrot.lane.b32.xlu0 %v929, 15
      %v949 = vpop.permute.xlu0 %948
      %v950 = vsel %vm411, %v947, %v949
      %v951 = vsel %vm411, %v949, %v947
      %v952 = vmul.f32 %v951, %v420
      %v953 = vmul.f32 %v950, %v424
      %954 = vrot.lane.b32.xlu0 %v928, 1
      %v955 = vpop.permute.xlu0 %954
      %956 = vrot.lane.b32.xlu0 %v929, 1
      %v957 = vpop.permute.xlu0 %956
      %v958 = vsel %vm433, %v955, %v957
      %v959 = vsel %vm433, %v957, %v955
      %v960 = vmul.f32 %v959, %v442
      %v961 = vmul.f32 %v958, %v446
      %962 = vrot.lane.b32.xlu0 %v928, 127
      %v963 = vpop.permute.xlu0 %962
      %964 = vrot.lane.b32.xlu0 %v929, 127
      %v965 = vpop.permute.xlu0 %964
      %v966 = vsel %vm455, %v963, %v965
      %v967 = vsel %vm455, %v965, %v963
      %v968 = vmul.f32 %v966, %v464
      %v969 = vmul.f32 %v967, %v468
      %970 = vrot.lane.b32.xlu0 %v928, 113
      %v971 = vpop.permute.xlu0 %970
      %972 = vrot.lane.b32.xlu0 %v929, 113
      %v973 = vpop.permute.xlu0 %972
      %v974 = vsel %vm477, %v971, %v973
      %v975 = vsel %vm477, %v973, %v971
      %v976 = vmul.f32 %v974, %v486
      %v977 = vmul.f32 %v975, %v490
      %978 = vrot.lane.b32.xlu0 %v928, 112
      %v979 = vpop.permute.xlu0 %978
      %980 = vrot.lane.b32.xlu0 %v929, 112
      %v981 = vpop.permute.xlu0 %980
      %v982 = vsel %vm499, %v979, %v981
      %v983 = vsel %vm499, %v981, %v979
      %v984 = vmul.f32 %v982, %v508
      %v985 = vmul.f32 %v983, %v512
      %986 = vrot.lane.b32.xlu0 %v928, 111
      %v987 = vpop.permute.xlu0 %986
      %988 = vrot.lane.b32.xlu0 %v929, 111
      %v989 = vpop.permute.xlu0 %988
      %v990 = vsel %vm521, %v987, %v989
      %v991 = vsel %vm521, %v989, %v987
      %v992 = vmul.f32 %v990, %v530
      %v993 = vmul.f32 %v991, %v534
      %v994 = vld [vmem:[%s8] sm:$0xff]
      %v995 = vld [vmem:[%s9] sm:$0xff]
      %997 = vset.pattern.permute.xlu0 0
      %998 = vperm.xlu0 %997, %v995
      %v999 = vpop.permute.xlu0 %998
      %v1002 = vsel %vm546, %v994, 0
      %1004 = vmatprep.subr.mxu0 0.0
      %1005 = vmatpush1.msra.mxu0 0.0
      %1006 = vmatprep.subr.mxu0 0.0
      %1007 = vmatpush1.msra.mxu0 0.0
      %1008 = vmatprep.subr.mxu0 0.0
      %1009 = vmatpush1.msra.mxu0 0.0
      %1010 = vmatprep.subr.mxu0 0.0
      %1011 = vmatpush1.msra.mxu0 0.0
      %1012 = vmatprep.subr.mxu0 0.0
      %1013 = vmatpush1.msra.mxu0 0.0
      %1014 = vmatprep.subr.mxu0 0.0
      %1015 = vmatpush1.msra.mxu0 0.0
      %1016 = vmatprep.subr.mxu0 0.0
      %1017 = vmatpush1.msra.mxu0 0.0
      %1018 = vmatprep.subr.mxu0 %v993
      %1019 = vmatpush1.msra.mxu0 %v992
      %1020 = vmatprep.subr.mxu0 %v985
      %1021 = vmatpush1.msra.mxu0 %v984
      %1022 = vmatprep.subr.mxu0 %v977
      %1023 = vmatpush1.msra.mxu0 %v976
      %1024 = vmatprep.subr.mxu0 %v969
      %1025 = vmatpush1.msra.mxu0 %v968
      %1026 = vmatprep.subr.mxu0 %v929
      %1027 = vmatpush1.msra.mxu0 %v928
      %1028 = vmatprep.subr.mxu0 %v961
      %1029 = vmatpush1.msra.mxu0 %v960
      %1030 = vmatprep.subr.mxu0 %v953
      %1031 = vmatpush1.msra.mxu0 %v952
      %1032 = vmatprep.subr.mxu0 %v945
      %1033 = vmatpush1.msra.mxu0 %v944
      %1034 = vmatprep.subr.mxu0 %v937
      %1035 = vmatpush1.msra.mxu0 %v936
      %1036 = vmatprep.subr.mxu0 0.0
      %1037 = vmatpush2.msra.mxu0 0.0
      %1038 = vmatprep.subr.mxu0 0.0
      %1039 = vmatpush2.msra.mxu0 0.0
      %1040 = vmatprep.subr.mxu0 0.0
      %1041 = vmatpush2.msra.mxu0 0.0
      %1042 = vmatprep.subr.mxu0 0.0
      %1043 = vmatpush2.msra.mxu0 0.0
      %1044 = vmatprep.subr.mxu0 0.0
      %1045 = vmatpush2.msra.mxu0 0.0
      %1046 = vmatprep.subr.mxu0 0.0
      %1047 = vmatpush2.msra.mxu0 0.0
      %1048 = vmatprep.subr.mxu0 0.0
      %1049 = vmatpush2.msra.mxu0 0.0
      %1050 = vmatprep.subr.mxu0 0.0
      %1051 = vmatpush2.msra.mxu0 0.0
      %1052 = vmatprep.subr.mxu0 0.0
      %1053 = vmatpush2.msra.mxu0 0.0
      %1054 = vmatprep.subr.mxu0 0.0
      %1055 = vmatpush2.msra.mxu0 0.0
      %1056 = vmatprep.subr.mxu0 0.0
      %1057 = vmatpush2.msra.mxu0 0.0
      %1058 = vmatprep.subr.mxu0 0.0
      %1059 = vmatpush2.msra.mxu0 0.0
      %1060 = vmatprep.subr.mxu0 0.0
      %1061 = vmatpush2.msra.mxu0 0.0
      %1062 = vmatprep.subr.mxu0 0.0
      %1063 = vmatpush2.msra.mxu0 0.0
      %1064 = vmatprep.subr.mxu0 0.0
      %1065 = vmatpush2.msra.mxu0 0.0
      %1066 = vmatprep.subr.mxu0 0.0
      %1067 = vmatpush2.msra.mxu0 0.0
      %1068 = vmatprep.mubr.f32.mxu0 0.0
      %1069 = vmatmul.mubr.f32.gmra.mxu0 %v1002
      %v1070 = vpop.f32.mrf.mxu0
      %v1071 = vadd.f32 %v999, %v1070
      %v1072 = vpop.f32.mrf.mxu0
      %v1073 = vadd.f32 %v999, %v1072
      %1074 = vdwg.mxu0
      %v1075 = vadd.f32 %v777, %v1071
      %v1076 = vadd.f32 %v778, %v1073
      %vm1077 = vcmp.ge.f32.partialorder %v1075, 0.0
      %vm1078 = vcmp.ge.f32.partialorder %v1076, 0.0
      %v1079 = vmul.f32 %v1075, 0.01
      %v1080 = vmul.f32 %v1076, 0.01
      %v1081 = vsel %vm1077, %v1075, %v1079
      %v1082 = vsel %vm1078, %v1076, %v1080
      %1083 = vst [vmem:[%s359] sm:$0xff] %v1081
      %1084 = vst [vmem:[%s359 + $0x8] sm:$0xff] %v1082
      %p1085 = scmp.lt.s32.totalorder %s21, 1
      %s1086 = scalar_select %p1085, %s21, 1
      %s1087 = smul.addr %s1086, 2
      %s1088 = smul.addr %s1087, 8
      %s1089 = scalar_lea.vmem %s10, %s1088
      // Predicated region
      $region61: #{group_forward.1} parent=59 // pred_check
        %p1090 = pneg %p254
      $region62: #{group_forward.1} parent=59 // pred_check_branch
        %1092 = sbr.rel (%p1090) target = $region64
      $region63: #{group_forward.1} parent=59 // pred_region
        _
      $region64: #{group_forward.1} parent=59 // pred_fallthru
        _
    $region60: #{group_forward.1} parent=5 // pred_fallthru
      _
    %p1093 = scmp.le.s32.totalorder 2, %s16
    // Predicated region
    $region65: #{group_forward.1} parent=5 // pred_check
      %p1094 = pneg %p1093
    $region66: #{group_forward.1} parent=5 // pred_check_branch
      %1096 = sbr.rel (%p1094) target = $region68
    $region67: #{group_forward.1} parent=5 // pred_region
      %s1097 = ssub.s32 %s16, 2
      // Predicated region
      $region69: #{group_forward.1} parent=67 // pred_check
        %p1098 = pneg %p260
      $region70: #{group_forward.1} parent=67 // pred_check_branch
        %1100 = sbr.rel (%p1098) target = $region72
      $region71: #{group_forward.1} parent=67 // pred_region
        %p1101 = scmp.lt.s32.totalorder %s22, 1
        %s1102 = scalar_select %p1101, %s22, 1
        %s1103 = smul.addr %s1102, 2
        %s1104 = smul.addr %s1103, 8
        %s1105 = scalar_lea.vmem %s10, %s1104
      $region72: #{group_forward.1} parent=67 // pred_fallthru
        _
    $region68: #{group_forward.1} parent=5 // pred_fallthru
      _
  $region6: #{group_forward.1} parent=0 // loop_footer
    %s20 = sadd.s32 1, %s16
  $region7: #{group_forward.1} parent=0 // loop_footer_branch
    %15 = sbr.rel target = $region3
  $region8: #{group_forward.1} parent=0 // loop_exit
    _

</llo_original>
